<compile_context>
chip_gen: v7x
topology: tpu7x:2x2x1
jax: 0.10.0
libtpu: 0.0.40
codegen_flags: <defaults>
</compile_context>

<pallas_src>
import math
import jax
import jax.numpy as jnp
from jax.experimental import pallas as pl
from jax.experimental.pallas import tpu as pltpu

# ---------------- module hyper-parameters (consistent with the forward) -------
INPLANES = 32
PLANES = 32                       # residual add requires planes == inplanes
SCALE = 8
KSIZE = 3
DIL = 2
WIDTH = int(math.floor(PLANES / SCALE))        # 4
CMID = WIDTH * SCALE                           # 32
NUMS = SCALE - 1                               # 7
NUM_PAD = (KSIZE // 2) * DIL                   # 2
SE_BOTTLENECK = 128
BN_EPS = 1e-5

# ---------------- problem size / kernel layout --------------------------------
BATCH = 4
TIME = 128                        # multiple of 128 -> lane-dense stores
BB = 2                            # batch elements per grid step
GRID = BATCH // BB                # 2 grid steps (parallel across v7x's 2 TCs)
LANES_BLK = BB * TIME             # 256 lanes per grid step
assert TIME % 128 == 0 and BATCH % BB == 0

WPAD = 8                          # pad each Res2Net split to the 8-sublane granule
CPAD = SCALE * WPAD               # 64


# ------------------------------- Pallas kernel --------------------------------
def _bottle2neck_kernel(x_ref, w1_ref, v1_ref, w2_ref, v2_ref, w3_ref, v3_ref,
                        wse1_ref, bse1_ref, wse2_ref, bse2_ref, out_ref):
    f32 = jnp.float32
    x = x_ref[...].astype(f32)                                    # (INPLANES, LANES_BLK)

    # conv1 (1x1) -> relu -> bn1 (folded scale/shift); bias/BN loaded once.
    v1 = v1_ref[...]                                              # (CPAD, 3)
    h = jnp.dot(w1_ref[...], x, preferred_element_type=f32) + v1[:, 0:1]
    h = jnp.maximum(h, 0.0) * v1[:, 1:2] + v1[:, 2:3]             # (CPAD, LANES_BLK)

    # Constants for the dilated taps, hoisted out of the serial branch chain.
    # Lanes are batch-major contiguous TIME blocks, so per-batch boundary
    # masking is (lane % TIME).
    pos = jax.lax.broadcasted_iota(jnp.int32, (WPAD, LANES_BLK), 1) % TIME
    mask_lo = (pos >= NUM_PAD).astype(f32)            # tap at t - NUM_PAD valid
    mask_hi = (pos < TIME - NUM_PAD).astype(f32)      # tap at t + NUM_PAD valid

    # Bulk-load the branch weights / bias / BN once (one load instead of many
    # tiny per-iteration masked loads).
    w2 = w2_ref[...]                                              # (NUMS, WPAD, K*WPAD)
    v2 = v2_ref[...]                                              # (NUMS, WPAD, 3)

    # Res2Net hierarchical dilated convs: one matmul per branch (serial chain).
    # Splits stay in registers; no VMEM scratch round-trip before conv3.
    splits = []
    sp = h[0:WPAD, :]
    for i in range(NUMS):
        if i > 0:
            sp = sp + h[i * WPAD:(i + 1) * WPAD, :]
        # dilation-shifted taps via XLU lane rotations + boundary masks
        tap_m = pltpu.roll(sp, NUM_PAD, axis=1) * mask_lo               # sp[:, t-PAD]
        tap_p = pltpu.roll(sp, LANES_BLK - NUM_PAD, axis=1) * mask_hi   # sp[:, t+PAD]
        xp = jnp.concatenate([tap_m, sp, tap_p], axis=0)          # (KSIZE*WPAD, LANES)
        conv = jnp.dot(w2[i], xp, preferred_element_type=f32)     # (WPAD, LANES)
        sp = jnp.maximum(conv + v2[i, :, 0:1], 0.0)
        sp = sp * v2[i, :, 1:2] + v2[i, :, 2:3]
        splits.append(sp)
    splits.append(h[NUMS * WPAD:, :])                             # untouched last split
    cat = jnp.concatenate(splits, axis=0)                         # (CPAD, LANES_BLK)

    # conv3 (1x1) -> relu -> bn3: single matmul over the fused splits
    v3 = v3_ref[...]                                              # (PLANES, 3)
    o = jnp.dot(w3_ref[...], cat, preferred_element_type=f32) + v3[:, 0:1]
    o = jnp.maximum(o, 0.0) * v3[:, 1:2] + v3[:, 2:3]             # (PLANES, LANES_BLK)

    # SE module: per-batch-segment global average pool via lane reductions.
    pooled = jnp.concatenate(
        [jnp.mean(o[:, b * TIME:(b + 1) * TIME], axis=1, keepdims=True)
         for b in range(BB)], axis=1)                             # (PLANES, BB)
    z = jnp.dot(wse1_ref[...], pooled, preferred_element_type=f32) + bse1_ref[...]
    z = jnp.maximum(z, 0.0)
    z = jnp.dot(wse2_ref[...], z, preferred_element_type=f32) + bse2_ref[...]
    gate = jax.nn.sigmoid(z)                                      # (PLANES, BB)

    # SE gating per batch segment + residual add; each store is a 128-lane
    # aligned, unmasked slab.
    for b in range(BB):
        sl = slice(b * TIME, (b + 1) * TIME)
        out_ref[:, sl] = (o[:, sl] * gate[:, b:b + 1] + x[:, sl]).astype(out_ref.dtype)


# --------------------- parameter packing / padding for the kernel -------------
def prepare_params(p):
    """Pack / pad PyTorch-layout parameters for the kernel. Call ONCE at init."""
    def pad_split_rows(a):
        # (SCALE*WIDTH, ...) -> (SCALE*WPAD, ...): split i lands at rows
        # [i*WPAD, i*WPAD+WIDTH); padded rows are zero.
        a = a.reshape((SCALE, WIDTH) + a.shape[1:])
        pad = [(0, 0), (0, WPAD - WIDTH)] + [(0, 0)] * (a.ndim - 2)
        return jnp.pad(a, pad).reshape((SCALE * WPAD,) + a.shape[2:])

    w1 = pad_split_rows(p['w1'])                                   # (CPAD, INPLANES)
    v1 = pad_split_rows(jnp.concatenate([p['b1'], p['s1'], p['t1']], axis=1))

    # dilated convs: (NUMS, O, I, K) -> (NUMS, WPAD, K*WPAD) so that
    # w2[i, o, k*WPAD + c] == torch_w2[i, o, c, k]
    w2 = jnp.pad(p['w2'], ((0, 0), (0, WPAD - WIDTH), (0, WPAD - WIDTH), (0, 0)))
    w2 = jnp.transpose(w2, (0, 1, 3, 2)).reshape(NUMS, WPAD, KSIZE * WPAD)
    v2 = jnp.concatenate([p['b2'], p['s2'], p['t2']], axis=2)      # (NUMS, WIDTH, 3)
    v2 = jnp.pad(v2, ((0, 0), (0, WPAD - WIDTH), (0, 0)))          # (NUMS, WPAD, 3)

    # conv3: pad the input-channel axis to the split-padded layout
    w3 = p['w3'].reshape(PLANES, SCALE, WIDTH)
    w3 = jnp.pad(w3, ((0, 0), (0, 0), (0, WPAD - WIDTH))).reshape(PLANES, CPAD)
    v3 = jnp.concatenate([p['b3'], p['s3'], p['t3']], axis=1)      # (PLANES, 3)

    return dict(w1=w1, v1=v1, w2=w2, v2=v2, w3=w3, v3=v3,
                wse1=p['wse1'], bse1=p['bse1'], wse2=p['wse2'], bse2=p['bse2'])


# ------------------------------- wrapper ---------------------------------------
_PARAM_ORDER = ('w1', 'v1', 'w2', 'v2', 'w3', 'v3', 'wse1', 'bse1', 'wse2', 'bse2')

_LANES_TOTAL = BATCH * TIME
_COST = pl.CostEstimate(
    flops=(2 * (CMID * INPLANES + NUMS * WPAD * KSIZE * WPAD + PLANES * CPAD)
           * _LANES_TOTAL + 4 * SE_BOTTLENECK * PLANES * BATCH),
    transcendentals=PLANES * BATCH,
    bytes_accessed=(2 * INPLANES * _LANES_TOTAL * 4
                    + (CPAD * INPLANES + NUMS * WPAD * KSIZE * WPAD
                       + PLANES * CPAD + 2 * SE_BOTTLENECK * PLANES) * 4),
)


def _const_spec(shape):
    nd = len(shape)
    return pl.BlockSpec(shape, lambda g, _nd=nd: (0,) * _nd)


@jax.jit
def bottle2neck_forward(x, kp):
    B, Cin, T = x.shape
    assert Cin == INPLANES and INPLANES == PLANES and B == BATCH and T == TIME

    # fold batch into the lane (time) axis: (B, C, T) -> (C, B*T), batch-major
    x2 = jnp.transpose(x, (1, 0, 2)).reshape(Cin, B * T)
    params = [kp[k] for k in _PARAM_ORDER]

    out2 = pl.pallas_call(
        _bottle2neck_kernel,
        out_shape=jax.ShapeDtypeStruct((PLANES, B * T), x.dtype),
        grid=(GRID,),
        in_specs=[pl.BlockSpec((INPLANES, LANES_BLK), lambda g: (0, g))]
                 + [_const_spec(p.shape) for p in params],
        out_specs=pl.BlockSpec((PLANES, LANES_BLK), lambda g: (0, g)),
        compiler_params=pltpu.CompilerParams(
            dimension_semantics=("parallel",)),
        cost_estimate=_COST,
    )(x2, *params)

    # back to PyTorch NCT layout
    return out2.reshape(PLANES, B, T).transpose(1, 0, 2)


# ------------------------------ parameter init ---------------------------------
def init_params(key):
    nk = iter(jax.random.split(key, 64))    # plenty of keys (46 are consumed)

    def w(shape, scale=0.1):
        return jax.random.normal(next(nk), shape, jnp.float32) * scale

    def bn(c):
        gamma = 1.0 + 0.1 * jax.random.normal(next(nk), (c, 1), jnp.float32)
        beta = 0.1 * jax.random.normal(next(nk), (c, 1), jnp.float32)
        mean = 0.1 * jax.random.normal(next(nk), (c, 1), jnp.float32)
        var = jax.random.uniform(next(nk), (c, 1), jnp.float32, 0.5, 1.5)
        scale = gamma / jnp.sqrt(var + BN_EPS)
        shift = beta - mean * scale
        return scale, shift

    p = {}
    p['w1'] = w((CMID, INPLANES))
    p['b1'] = w((CMID, 1))
    p['s1'], p['t1'] = bn(CMID)

    p['w2'] = w((NUMS, WIDTH, WIDTH, KSIZE))
    p['b2'] = w((NUMS, WIDTH, 1))
    s2, t2 = [], []
    for _ in range(NUMS):
        s, t = bn(WIDTH)
        s2.append(s); t2.append(t)
    p['s2'] = jnp.stack(s2); p['t2'] = jnp.stack(t2)

    p['w3'] = w((PLANES, CMID))
    p['b3'] = w((PLANES, 1))
    p['s3'], p['t3'] = bn(PLANES)

    p['wse1'] = w((SE_BOTTLENECK, PLANES))
    p['bse1'] = w((SE_BOTTLENECK, 1))
    p['wse2'] = w((PLANES, SE_BOTTLENECK))
    p['bse2'] = w((PLANES, 1))
    return p


# ------------------------------ pure-JAX reference ------------------------------
def reference(x, p):
    h = jnp.einsum('oc,bct->bot', p['w1'], x) + p['b1'][None]
    h = jnp.maximum(h, 0.0)
    h = h * p['s1'][None] + p['t1'][None]
    outs = []
    sp = None
    for i in range(NUMS):
        chunk = h[:, i * WIDTH:(i + 1) * WIDTH]
        sp = chunk if i == 0 else sp + chunk
        conv = jax.lax.conv_general_dilated(
            sp, p['w2'][i], window_strides=(1,),
            padding=[(NUM_PAD, NUM_PAD)], rhs_dilation=(DIL,),
            dimension_numbers=('NCH', 'OIH', 'NCH'))
        sp = conv + p['b2'][i][None]
        sp = jnp.maximum(sp, 0.0)
        sp = sp * p['s2'][i][None] + p['t2'][i][None]
        outs.append(sp)
    outs.append(h[:, NUMS * WIDTH:])
    cat = jnp.concatenate(outs, axis=1)
    o = jnp.einsum('oc,bct->bot', p['w3'], cat) + p['b3'][None]
    o = jnp.maximum(o, 0.0)
    o = o * p['s3'][None] + p['t3'][None]
    pooled = jnp.mean(o, axis=-1, keepdims=True)
    z = jnp.einsum('oc,bcl->bol', p['wse1'], pooled) + p['bse1'][None]
    z = jnp.maximum(z, 0.0)
    z = jnp.einsum('oc,bcl->bol', p['wse2'], z) + p['bse2'][None]
    gate = jax.nn.sigmoid(z)
    return o * gate + x


# ----------------------------------- main ---------------------------------------
if __name__ == "__main__":
    key = jax.random.PRNGKey(0)
    kx, kparam = jax.random.split(key)
    x = jax.random.normal(kx, (BATCH, INPLANES, TIME), jnp.float32)
    params = init_params(kparam)

    # pack / pad parameters ONCE, outside the jitted per-call path
    kp = prepare_params(params)

    out = jax.block_until_ready(bottle2neck_forward(x, kp))
    ref = jax.block_until_ready(reference(x, params))

    assert out.shape == (BATCH, PLANES, TIME)
    err = float(jnp.max(jnp.abs(out - ref)))
    assert err < 1e-3, f"max abs err {err}"
    print("KERNEL_OK")
</pallas_src>

<mosaic_0001>
module attributes {stable_mosaic.version = 11 : i64} {
  func.func @_bottle2neck_kernel(%arg0: i32, %arg1: memref<32x256xf32, #tpu.memory_space<vmem>>, %arg2: memref<64x32xf32, #tpu.memory_space<vmem>>, %arg3: memref<64x3xf32, #tpu.memory_space<vmem>>, %arg4: memref<7x8x24xf32, #tpu.memory_space<vmem>>, %arg5: memref<7x8x3xf32, #tpu.memory_space<vmem>>, %arg6: memref<32x64xf32, #tpu.memory_space<vmem>>, %arg7: memref<32x3xf32, #tpu.memory_space<vmem>>, %arg8: memref<128x32xf32, #tpu.memory_space<vmem>>, %arg9: memref<128x1xf32, #tpu.memory_space<vmem>>, %arg10: memref<32x128xf32, #tpu.memory_space<vmem>>, %arg11: memref<32x1xf32, #tpu.memory_space<vmem>>, %arg12: memref<32x256xf32, #tpu.memory_space<vmem>>) attributes {dimension_semantics = [#tpu.dimension_semantics<parallel>], iteration_bounds = array<i64: 2>, scalar_prefetch = 0 : i64, scratch_operands = 0 : i64, tpu.core_type = #tpu.core_type<tc>, window_params = [{transform_indices = @transform_0, window_bounds = array<i64: 32, 256>}, {pipeline_mode = #tpu.pipeline_mode<synchronous>, transform_indices = @transform_1, window_bounds = array<i64: 64, 32>}, {pipeline_mode = #tpu.pipeline_mode<synchronous>, transform_indices = @transform_2, window_bounds = array<i64: 64, 3>}, {pipeline_mode = #tpu.pipeline_mode<synchronous>, transform_indices = @transform_3, window_bounds = array<i64: 7, 8, 24>}, {pipeline_mode = #tpu.pipeline_mode<synchronous>, transform_indices = @transform_4, window_bounds = array<i64: 7, 8, 3>}, {pipeline_mode = #tpu.pipeline_mode<synchronous>, transform_indices = @transform_5, window_bounds = array<i64: 32, 64>}, {pipeline_mode = #tpu.pipeline_mode<synchronous>, transform_indices = @transform_6, window_bounds = array<i64: 32, 3>}, {pipeline_mode = #tpu.pipeline_mode<synchronous>, transform_indices = @transform_7, window_bounds = array<i64: 128, 32>}, {pipeline_mode = #tpu.pipeline_mode<synchronous>, transform_indices = @transform_8, window_bounds = array<i64: 128, 1>}, {pipeline_mode = #tpu.pipeline_mode<synchronous>, transform_indices = @transform_9, window_bounds = array<i64: 32, 128>}, {pipeline_mode = #tpu.pipeline_mode<synchronous>, transform_indices = @transform_10, window_bounds = array<i64: 32, 1>}, {transform_indices = @transform_11, window_bounds = array<i64: 32, 256>}]} {
    %c0 = arith.constant 0 : index
    %c0_0 = arith.constant 0 : index
    %0 = vector.load %arg1[%c0, %c0_0] : memref<32x256xf32, #tpu.memory_space<vmem>>, vector<32x256xf32>
    %c0_1 = arith.constant 0 : index
    %c0_2 = arith.constant 0 : index
    %1 = vector.load %arg3[%c0_1, %c0_2] : memref<64x3xf32, #tpu.memory_space<vmem>>, vector<64x3xf32>
    %c0_3 = arith.constant 0 : index
    %c0_4 = arith.constant 0 : index
    %2 = vector.load %arg2[%c0_3, %c0_4] : memref<64x32xf32, #tpu.memory_space<vmem>>, vector<64x32xf32>
    %cst = arith.constant dense<0.000000e+00> : vector<64x256xf32>
    %3 = tpu.matmul %2, %0, %cst {dimension_numbers = #tpu.dot_dimension_numbers<[1], [0], [0], [1], [0, 0, 1, 1], [], []>} : vector<64x32xf32>, vector<32x256xf32>, vector<64x256xf32> -> vector<64x256xf32>
    %4 = vector.extract_strided_slice %1 {offsets = [0, 0], sizes = [64, 1], strides = [1, 1]} : vector<64x3xf32> to vector<64x1xf32>
    %5 = vector.broadcast %4 : vector<64x1xf32> to vector<64x256xf32>
    %6 = arith.addf %3, %5 : vector<64x256xf32>
    %cst_5 = arith.constant 0.000000e+00 : f32
    %7 = vector.broadcast %cst_5 : f32 to vector<64x256xf32>
    %8 = arith.maximumf %6, %7 : vector<64x256xf32>
    %9 = vector.extract_strided_slice %1 {offsets = [0, 1], sizes = [64, 1], strides = [1, 1]} : vector<64x3xf32> to vector<64x1xf32>
    %10 = vector.broadcast %9 : vector<64x1xf32> to vector<64x256xf32>
    %11 = arith.mulf %8, %10 : vector<64x256xf32>
    %12 = vector.extract_strided_slice %1 {offsets = [0, 2], sizes = [64, 1], strides = [1, 1]} : vector<64x3xf32> to vector<64x1xf32>
    %13 = vector.broadcast %12 : vector<64x1xf32> to vector<64x256xf32>
    %14 = arith.addf %11, %13 : vector<64x256xf32>
    %15 = tpu.iota {dimensions = array<i32: 1>} : vector<8x256xi32>
    %c128_i32 = arith.constant 128 : i32
    %c0_i32 = arith.constant 0 : i32
    %16 = arith.cmpi eq, %c128_i32, %c0_i32 : i32
    %c1_i32 = arith.constant 1 : i32
    %17 = arith.select %16, %c1_i32, %c128_i32 : i32
    %18 = vector.broadcast %17 : i32 to vector<8x256xi32>
    %19 = arith.remsi %15, %18 : vector<8x256xi32>
    %c0_i32_6 = arith.constant 0 : i32
    %20 = vector.broadcast %c0_i32_6 : i32 to vector<8x256xi32>
    %21 = arith.cmpi ne, %19, %20 : vector<8x256xi32>
    %c0_i32_7 = arith.constant 0 : i32
    %22 = vector.broadcast %c0_i32_7 : i32 to vector<8x256xi32>
    %23 = arith.cmpi slt, %19, %22 : vector<8x256xi32>
    %c0_i32_8 = arith.constant 0 : i32
    %24 = arith.cmpi slt, %17, %c0_i32_8 : i32
    %25 = vector.broadcast %24 : i1 to vector<8x256xi1>
    %26 = vector.broadcast %25 : vector<8x256xi1> to vector<8x256xi1>
    %27 = arith.xori %23, %26 : vector<8x256xi1>
    %28 = arith.andi %27, %21 : vector<8x256xi1>
    %29 = vector.broadcast %17 : i32 to vector<8x256xi32>
    %30 = arith.addi %19, %29 : vector<8x256xi32>
    %31 = arith.select %28, %30, %19 : vector<8x256xi1>, vector<8x256xi32>
    %c2_i32 = arith.constant 2 : i32
    %32 = vector.broadcast %c2_i32 : i32 to vector<8x256xi32>
    %33 = arith.cmpi sge, %31, %32 : vector<8x256xi32>
    %34 = arith.extui %33 : vector<8x256xi1> to vector<8x256xi32>
    %35 = arith.sitofp %34 : vector<8x256xi32> to vector<8x256xf32>
    %c126_i32 = arith.constant 126 : i32
    %36 = vector.broadcast %c126_i32 : i32 to vector<8x256xi32>
    %37 = arith.cmpi slt, %31, %36 : vector<8x256xi32>
    %38 = arith.extui %37 : vector<8x256xi1> to vector<8x256xi32>
    %39 = arith.sitofp %38 : vector<8x256xi32> to vector<8x256xf32>
    %c0_9 = arith.constant 0 : index
    %c0_10 = arith.constant 0 : index
    %c0_11 = arith.constant 0 : index
    %40 = vector.load %arg4[%c0_9, %c0_10, %c0_11] : memref<7x8x24xf32, #tpu.memory_space<vmem>>, vector<7x8x24xf32>
    %c0_12 = arith.constant 0 : index
    %c0_13 = arith.constant 0 : index
    %c0_14 = arith.constant 0 : index
    %41 = vector.load %arg5[%c0_12, %c0_13, %c0_14] : memref<7x8x3xf32, #tpu.memory_space<vmem>>, vector<7x8x3xf32>
    %42 = vector.extract_strided_slice %14 {offsets = [0, 0], sizes = [8, 256], strides = [1, 1]} : vector<64x256xf32> to vector<8x256xf32>
    %c2_i32_15 = arith.constant 2 : i32
    %43 = tpu.dynamic_rotate %42 by %c2_i32_15 dim 1 : vector<8x256xf32>, i32 -> vector<8x256xf32>
    %44 = arith.mulf %43, %35 : vector<8x256xf32>
    %c254_i32 = arith.constant 254 : i32
    %45 = tpu.dynamic_rotate %42 by %c254_i32 dim 1 : vector<8x256xf32>, i32 -> vector<8x256xf32>
    %46 = arith.mulf %45, %39 : vector<8x256xf32>
    %47 = tpu.concatenate %44, %42, %46 in 0 : vector<8x256xf32>, vector<8x256xf32>, vector<8x256xf32> -> vector<24x256xf32>
    %48 = vector.extract_strided_slice %40 {offsets = [0, 0, 0], sizes = [1, 8, 24], strides = [1, 1, 1]} : vector<7x8x24xf32> to vector<1x8x24xf32>
    %49 = vector.shape_cast %48 : vector<1x8x24xf32> to vector<8x24xf32>
    %cst_16 = arith.constant dense<0.000000e+00> : vector<8x256xf32>
    %50 = tpu.matmul %49, %47, %cst_16 {dimension_numbers = #tpu.dot_dimension_numbers<[1], [0], [0], [1], [0, 0, 1, 1], [], []>} : vector<8x24xf32>, vector<24x256xf32>, vector<8x256xf32> -> vector<8x256xf32>
    %51 = vector.extract_strided_slice %41 {offsets = [0, 0, 0], sizes = [1, 8, 1], strides = [1, 1, 1]} : vector<7x8x3xf32> to vector<1x8x1xf32>
    %52 = vector.shape_cast %51 : vector<1x8x1xf32> to vector<8x1xf32>
    %53 = vector.broadcast %52 : vector<8x1xf32> to vector<8x256xf32>
    %54 = arith.addf %50, %53 : vector<8x256xf32>
    %cst_17 = arith.constant 0.000000e+00 : f32
    %55 = vector.broadcast %cst_17 : f32 to vector<8x256xf32>
    %56 = arith.maximumf %54, %55 : vector<8x256xf32>
    %57 = vector.extract_strided_slice %41 {offsets = [0, 0, 1], sizes = [1, 8, 1], strides = [1, 1, 1]} : vector<7x8x3xf32> to vector<1x8x1xf32>
    %58 = vector.shape_cast %57 : vector<1x8x1xf32> to vector<8x1xf32>
    %59 = vector.broadcast %58 : vector<8x1xf32> to vector<8x256xf32>
    %60 = arith.mulf %56, %59 : vector<8x256xf32>
    %61 = vector.extract_strided_slice %41 {offsets = [0, 0, 2], sizes = [1, 8, 1], strides = [1, 1, 1]} : vector<7x8x3xf32> to vector<1x8x1xf32>
    %62 = vector.shape_cast %61 : vector<1x8x1xf32> to vector<8x1xf32>
    %63 = vector.broadcast %62 : vector<8x1xf32> to vector<8x256xf32>
    %64 = arith.addf %60, %63 : vector<8x256xf32>
    %65 = vector.extract_strided_slice %14 {offsets = [8, 0], sizes = [8, 256], strides = [1, 1]} : vector<64x256xf32> to vector<8x256xf32>
    %66 = arith.addf %64, %65 : vector<8x256xf32>
    %c2_i32_18 = arith.constant 2 : i32
    %67 = tpu.dynamic_rotate %66 by %c2_i32_18 dim 1 : vector<8x256xf32>, i32 -> vector<8x256xf32>
    %68 = arith.mulf %67, %35 : vector<8x256xf32>
    %c254_i32_19 = arith.constant 254 : i32
    %69 = tpu.dynamic_rotate %66 by %c254_i32_19 dim 1 : vector<8x256xf32>, i32 -> vector<8x256xf32>
    %70 = arith.mulf %69, %39 : vector<8x256xf32>
    %71 = tpu.concatenate %68, %66, %70 in 0 : vector<8x256xf32>, vector<8x256xf32>, vector<8x256xf32> -> vector<24x256xf32>
    %72 = vector.extract_strided_slice %40 {offsets = [1, 0, 0], sizes = [1, 8, 24], strides = [1, 1, 1]} : vector<7x8x24xf32> to vector<1x8x24xf32>
    %73 = vector.shape_cast %72 : vector<1x8x24xf32> to vector<8x24xf32>
    %cst_20 = arith.constant dense<0.000000e+00> : vector<8x256xf32>
    %74 = tpu.matmul %73, %71, %cst_20 {dimension_numbers = #tpu.dot_dimension_numbers<[1], [0], [0], [1], [0, 0, 1, 1], [], []>} : vector<8x24xf32>, vector<24x256xf32>, vector<8x256xf32> -> vector<8x256xf32>
    %75 = vector.extract_strided_slice %41 {offsets = [1, 0, 0], sizes = [1, 8, 1], strides = [1, 1, 1]} : vector<7x8x3xf32> to vector<1x8x1xf32>
    %76 = vector.shape_cast %75 : vector<1x8x1xf32> to vector<8x1xf32>
    %77 = vector.broadcast %76 : vector<8x1xf32> to vector<8x256xf32>
    %78 = arith.addf %74, %77 : vector<8x256xf32>
    %cst_21 = arith.constant 0.000000e+00 : f32
    %79 = vector.broadcast %cst_21 : f32 to vector<8x256xf32>
    %80 = arith.maximumf %78, %79 : vector<8x256xf32>
    %81 = vector.extract_strided_slice %41 {offsets = [1, 0, 1], sizes = [1, 8, 1], strides = [1, 1, 1]} : vector<7x8x3xf32> to vector<1x8x1xf32>
    %82 = vector.shape_cast %81 : vector<1x8x1xf32> to vector<8x1xf32>
    %83 = vector.broadcast %82 : vector<8x1xf32> to vector<8x256xf32>
    %84 = arith.mulf %80, %83 : vector<8x256xf32>
    %85 = vector.extract_strided_slice %41 {offsets = [1, 0, 2], sizes = [1, 8, 1], strides = [1, 1, 1]} : vector<7x8x3xf32> to vector<1x8x1xf32>
    %86 = vector.shape_cast %85 : vector<1x8x1xf32> to vector<8x1xf32>
    %87 = vector.broadcast %86 : vector<8x1xf32> to vector<8x256xf32>
    %88 = arith.addf %84, %87 : vector<8x256xf32>
    %89 = vector.extract_strided_slice %14 {offsets = [16, 0], sizes = [8, 256], strides = [1, 1]} : vector<64x256xf32> to vector<8x256xf32>
    %90 = arith.addf %88, %89 : vector<8x256xf32>
    %c2_i32_22 = arith.constant 2 : i32
    %91 = tpu.dynamic_rotate %90 by %c2_i32_22 dim 1 : vector<8x256xf32>, i32 -> vector<8x256xf32>
    %92 = arith.mulf %91, %35 : vector<8x256xf32>
    %c254_i32_23 = arith.constant 254 : i32
    %93 = tpu.dynamic_rotate %90 by %c254_i32_23 dim 1 : vector<8x256xf32>, i32 -> vector<8x256xf32>
    %94 = arith.mulf %93, %39 : vector<8x256xf32>
    %95 = tpu.concatenate %92, %90, %94 in 0 : vector<8x256xf32>, vector<8x256xf32>, vector<8x256xf32> -> vector<24x256xf32>
    %96 = vector.extract_strided_slice %40 {offsets = [2, 0, 0], sizes = [1, 8, 24], strides = [1, 1, 1]} : vector<7x8x24xf32> to vector<1x8x24xf32>
    %97 = vector.shape_cast %96 : vector<1x8x24xf32> to vector<8x24xf32>
    %cst_24 = arith.constant dense<0.000000e+00> : vector<8x256xf32>
    %98 = tpu.matmul %97, %95, %cst_24 {dimension_numbers = #tpu.dot_dimension_numbers<[1], [0], [0], [1], [0, 0, 1, 1], [], []>} : vector<8x24xf32>, vector<24x256xf32>, vector<8x256xf32> -> vector<8x256xf32>
    %99 = vector.extract_strided_slice %41 {offsets = [2, 0, 0], sizes = [1, 8, 1], strides = [1, 1, 1]} : vector<7x8x3xf32> to vector<1x8x1xf32>
    %100 = vector.shape_cast %99 : vector<1x8x1xf32> to vector<8x1xf32>
    %101 = vector.broadcast %100 : vector<8x1xf32> to vector<8x256xf32>
    %102 = arith.addf %98, %101 : vector<8x256xf32>
    %cst_25 = arith.constant 0.000000e+00 : f32
    %103 = vector.broadcast %cst_25 : f32 to vector<8x256xf32>
    %104 = arith.maximumf %102, %103 : vector<8x256xf32>
    %105 = vector.extract_strided_slice %41 {offsets = [2, 0, 1], sizes = [1, 8, 1], strides = [1, 1, 1]} : vector<7x8x3xf32> to vector<1x8x1xf32>
    %106 = vector.shape_cast %105 : vector<1x8x1xf32> to vector<8x1xf32>
    %107 = vector.broadcast %106 : vector<8x1xf32> to vector<8x256xf32>
    %108 = arith.mulf %104, %107 : vector<8x256xf32>
    %109 = vector.extract_strided_slice %41 {offsets = [2, 0, 2], sizes = [1, 8, 1], strides = [1, 1, 1]} : vector<7x8x3xf32> to vector<1x8x1xf32>
    %110 = vector.shape_cast %109 : vector<1x8x1xf32> to vector<8x1xf32>
    %111 = vector.broadcast %110 : vector<8x1xf32> to vector<8x256xf32>
    %112 = arith.addf %108, %111 : vector<8x256xf32>
    %113 = vector.extract_strided_slice %14 {offsets = [24, 0], sizes = [8, 256], strides = [1, 1]} : vector<64x256xf32> to vector<8x256xf32>
    %114 = arith.addf %112, %113 : vector<8x256xf32>
    %c2_i32_26 = arith.constant 2 : i32
    %115 = tpu.dynamic_rotate %114 by %c2_i32_26 dim 1 : vector<8x256xf32>, i32 -> vector<8x256xf32>
    %116 = arith.mulf %115, %35 : vector<8x256xf32>
    %c254_i32_27 = arith.constant 254 : i32
    %117 = tpu.dynamic_rotate %114 by %c254_i32_27 dim 1 : vector<8x256xf32>, i32 -> vector<8x256xf32>
    %118 = arith.mulf %117, %39 : vector<8x256xf32>
    %119 = tpu.concatenate %116, %114, %118 in 0 : vector<8x256xf32>, vector<8x256xf32>, vector<8x256xf32> -> vector<24x256xf32>
    %120 = vector.extract_strided_slice %40 {offsets = [3, 0, 0], sizes = [1, 8, 24], strides = [1, 1, 1]} : vector<7x8x24xf32> to vector<1x8x24xf32>
    %121 = vector.shape_cast %120 : vector<1x8x24xf32> to vector<8x24xf32>
    %cst_28 = arith.constant dense<0.000000e+00> : vector<8x256xf32>
    %122 = tpu.matmul %121, %119, %cst_28 {dimension_numbers = #tpu.dot_dimension_numbers<[1], [0], [0], [1], [0, 0, 1, 1], [], []>} : vector<8x24xf32>, vector<24x256xf32>, vector<8x256xf32> -> vector<8x256xf32>
    %123 = vector.extract_strided_slice %41 {offsets = [3, 0, 0], sizes = [1, 8, 1], strides = [1, 1, 1]} : vector<7x8x3xf32> to vector<1x8x1xf32>
    %124 = vector.shape_cast %123 : vector<1x8x1xf32> to vector<8x1xf32>
    %125 = vector.broadcast %124 : vector<8x1xf32> to vector<8x256xf32>
    %126 = arith.addf %122, %125 : vector<8x256xf32>
    %cst_29 = arith.constant 0.000000e+00 : f32
    %127 = vector.broadcast %cst_29 : f32 to vector<8x256xf32>
    %128 = arith.maximumf %126, %127 : vector<8x256xf32>
    %129 = vector.extract_strided_slice %41 {offsets = [3, 0, 1], sizes = [1, 8, 1], strides = [1, 1, 1]} : vector<7x8x3xf32> to vector<1x8x1xf32>
    %130 = vector.shape_cast %129 : vector<1x8x1xf32> to vector<8x1xf32>
    %131 = vector.broadcast %130 : vector<8x1xf32> to vector<8x256xf32>
    %132 = arith.mulf %128, %131 : vector<8x256xf32>
    %133 = vector.extract_strided_slice %41 {offsets = [3, 0, 2], sizes = [1, 8, 1], strides = [1, 1, 1]} : vector<7x8x3xf32> to vector<1x8x1xf32>
    %134 = vector.shape_cast %133 : vector<1x8x1xf32> to vector<8x1xf32>
    %135 = vector.broadcast %134 : vector<8x1xf32> to vector<8x256xf32>
    %136 = arith.addf %132, %135 : vector<8x256xf32>
    %137 = vector.extract_strided_slice %14 {offsets = [32, 0], sizes = [8, 256], strides = [1, 1]} : vector<64x256xf32> to vector<8x256xf32>
    %138 = arith.addf %136, %137 : vector<8x256xf32>
    %c2_i32_30 = arith.constant 2 : i32
    %139 = tpu.dynamic_rotate %138 by %c2_i32_30 dim 1 : vector<8x256xf32>, i32 -> vector<8x256xf32>
    %140 = arith.mulf %139, %35 : vector<8x256xf32>
    %c254_i32_31 = arith.constant 254 : i32
    %141 = tpu.dynamic_rotate %138 by %c254_i32_31 dim 1 : vector<8x256xf32>, i32 -> vector<8x256xf32>
    %142 = arith.mulf %141, %39 : vector<8x256xf32>
    %143 = tpu.concatenate %140, %138, %142 in 0 : vector<8x256xf32>, vector<8x256xf32>, vector<8x256xf32> -> vector<24x256xf32>
    %144 = vector.extract_strided_slice %40 {offsets = [4, 0, 0], sizes = [1, 8, 24], strides = [1, 1, 1]} : vector<7x8x24xf32> to vector<1x8x24xf32>
    %145 = vector.shape_cast %144 : vector<1x8x24xf32> to vector<8x24xf32>
    %cst_32 = arith.constant dense<0.000000e+00> : vector<8x256xf32>
    %146 = tpu.matmul %145, %143, %cst_32 {dimension_numbers = #tpu.dot_dimension_numbers<[1], [0], [0], [1], [0, 0, 1, 1], [], []>} : vector<8x24xf32>, vector<24x256xf32>, vector<8x256xf32> -> vector<8x256xf32>
    %147 = vector.extract_strided_slice %41 {offsets = [4, 0, 0], sizes = [1, 8, 1], strides = [1, 1, 1]} : vector<7x8x3xf32> to vector<1x8x1xf32>
    %148 = vector.shape_cast %147 : vector<1x8x1xf32> to vector<8x1xf32>
    %149 = vector.broadcast %148 : vector<8x1xf32> to vector<8x256xf32>
    %150 = arith.addf %146, %149 : vector<8x256xf32>
    %cst_33 = arith.constant 0.000000e+00 : f32
    %151 = vector.broadcast %cst_33 : f32 to vector<8x256xf32>
    %152 = arith.maximumf %150, %151 : vector<8x256xf32>
    %153 = vector.extract_strided_slice %41 {offsets = [4, 0, 1], sizes = [1, 8, 1], strides = [1, 1, 1]} : vector<7x8x3xf32> to vector<1x8x1xf32>
    %154 = vector.shape_cast %153 : vector<1x8x1xf32> to vector<8x1xf32>
    %155 = vector.broadcast %154 : vector<8x1xf32> to vector<8x256xf32>
    %156 = arith.mulf %152, %155 : vector<8x256xf32>
    %157 = vector.extract_strided_slice %41 {offsets = [4, 0, 2], sizes = [1, 8, 1], strides = [1, 1, 1]} : vector<7x8x3xf32> to vector<1x8x1xf32>
    %158 = vector.shape_cast %157 : vector<1x8x1xf32> to vector<8x1xf32>
    %159 = vector.broadcast %158 : vector<8x1xf32> to vector<8x256xf32>
    %160 = arith.addf %156, %159 : vector<8x256xf32>
    %161 = vector.extract_strided_slice %14 {offsets = [40, 0], sizes = [8, 256], strides = [1, 1]} : vector<64x256xf32> to vector<8x256xf32>
    %162 = arith.addf %160, %161 : vector<8x256xf32>
    %c2_i32_34 = arith.constant 2 : i32
    %163 = tpu.dynamic_rotate %162 by %c2_i32_34 dim 1 : vector<8x256xf32>, i32 -> vector<8x256xf32>
    %164 = arith.mulf %163, %35 : vector<8x256xf32>
    %c254_i32_35 = arith.constant 254 : i32
    %165 = tpu.dynamic_rotate %162 by %c254_i32_35 dim 1 : vector<8x256xf32>, i32 -> vector<8x256xf32>
    %166 = arith.mulf %165, %39 : vector<8x256xf32>
    %167 = tpu.concatenate %164, %162, %166 in 0 : vector<8x256xf32>, vector<8x256xf32>, vector<8x256xf32> -> vector<24x256xf32>
    %168 = vector.extract_strided_slice %40 {offsets = [5, 0, 0], sizes = [1, 8, 24], strides = [1, 1, 1]} : vector<7x8x24xf32> to vector<1x8x24xf32>
    %169 = vector.shape_cast %168 : vector<1x8x24xf32> to vector<8x24xf32>
    %cst_36 = arith.constant dense<0.000000e+00> : vector<8x256xf32>
    %170 = tpu.matmul %169, %167, %cst_36 {dimension_numbers = #tpu.dot_dimension_numbers<[1], [0], [0], [1], [0, 0, 1, 1], [], []>} : vector<8x24xf32>, vector<24x256xf32>, vector<8x256xf32> -> vector<8x256xf32>
    %171 = vector.extract_strided_slice %41 {offsets = [5, 0, 0], sizes = [1, 8, 1], strides = [1, 1, 1]} : vector<7x8x3xf32> to vector<1x8x1xf32>
    %172 = vector.shape_cast %171 : vector<1x8x1xf32> to vector<8x1xf32>
    %173 = vector.broadcast %172 : vector<8x1xf32> to vector<8x256xf32>
    %174 = arith.addf %170, %173 : vector<8x256xf32>
    %cst_37 = arith.constant 0.000000e+00 : f32
    %175 = vector.broadcast %cst_37 : f32 to vector<8x256xf32>
    %176 = arith.maximumf %174, %175 : vector<8x256xf32>
    %177 = vector.extract_strided_slice %41 {offsets = [5, 0, 1], sizes = [1, 8, 1], strides = [1, 1, 1]} : vector<7x8x3xf32> to vector<1x8x1xf32>
    %178 = vector.shape_cast %177 : vector<1x8x1xf32> to vector<8x1xf32>
    %179 = vector.broadcast %178 : vector<8x1xf32> to vector<8x256xf32>
    %180 = arith.mulf %176, %179 : vector<8x256xf32>
    %181 = vector.extract_strided_slice %41 {offsets = [5, 0, 2], sizes = [1, 8, 1], strides = [1, 1, 1]} : vector<7x8x3xf32> to vector<1x8x1xf32>
    %182 = vector.shape_cast %181 : vector<1x8x1xf32> to vector<8x1xf32>
    %183 = vector.broadcast %182 : vector<8x1xf32> to vector<8x256xf32>
    %184 = arith.addf %180, %183 : vector<8x256xf32>
    %185 = vector.extract_strided_slice %14 {offsets = [48, 0], sizes = [8, 256], strides = [1, 1]} : vector<64x256xf32> to vector<8x256xf32>
    %186 = arith.addf %184, %185 : vector<8x256xf32>
    %c2_i32_38 = arith.constant 2 : i32
    %187 = tpu.dynamic_rotate %186 by %c2_i32_38 dim 1 : vector<8x256xf32>, i32 -> vector<8x256xf32>
    %188 = arith.mulf %187, %35 : vector<8x256xf32>
    %c254_i32_39 = arith.constant 254 : i32
    %189 = tpu.dynamic_rotate %186 by %c254_i32_39 dim 1 : vector<8x256xf32>, i32 -> vector<8x256xf32>
    %190 = arith.mulf %189, %39 : vector<8x256xf32>
    %191 = tpu.concatenate %188, %186, %190 in 0 : vector<8x256xf32>, vector<8x256xf32>, vector<8x256xf32> -> vector<24x256xf32>
    %192 = vector.extract_strided_slice %40 {offsets = [6, 0, 0], sizes = [1, 8, 24], strides = [1, 1, 1]} : vector<7x8x24xf32> to vector<1x8x24xf32>
    %193 = vector.shape_cast %192 : vector<1x8x24xf32> to vector<8x24xf32>
    %cst_40 = arith.constant dense<0.000000e+00> : vector<8x256xf32>
    %194 = tpu.matmul %193, %191, %cst_40 {dimension_numbers = #tpu.dot_dimension_numbers<[1], [0], [0], [1], [0, 0, 1, 1], [], []>} : vector<8x24xf32>, vector<24x256xf32>, vector<8x256xf32> -> vector<8x256xf32>
    %195 = vector.extract_strided_slice %41 {offsets = [6, 0, 0], sizes = [1, 8, 1], strides = [1, 1, 1]} : vector<7x8x3xf32> to vector<1x8x1xf32>
    %196 = vector.shape_cast %195 : vector<1x8x1xf32> to vector<8x1xf32>
    %197 = vector.broadcast %196 : vector<8x1xf32> to vector<8x256xf32>
    %198 = arith.addf %194, %197 : vector<8x256xf32>
    %cst_41 = arith.constant 0.000000e+00 : f32
    %199 = vector.broadcast %cst_41 : f32 to vector<8x256xf32>
    %200 = arith.maximumf %198, %199 : vector<8x256xf32>
    %201 = vector.extract_strided_slice %41 {offsets = [6, 0, 1], sizes = [1, 8, 1], strides = [1, 1, 1]} : vector<7x8x3xf32> to vector<1x8x1xf32>
    %202 = vector.shape_cast %201 : vector<1x8x1xf32> to vector<8x1xf32>
    %203 = vector.broadcast %202 : vector<8x1xf32> to vector<8x256xf32>
    %204 = arith.mulf %200, %203 : vector<8x256xf32>
    %205 = vector.extract_strided_slice %41 {offsets = [6, 0, 2], sizes = [1, 8, 1], strides = [1, 1, 1]} : vector<7x8x3xf32> to vector<1x8x1xf32>
    %206 = vector.shape_cast %205 : vector<1x8x1xf32> to vector<8x1xf32>
    %207 = vector.broadcast %206 : vector<8x1xf32> to vector<8x256xf32>
    %208 = arith.addf %204, %207 : vector<8x256xf32>
    %209 = vector.extract_strided_slice %14 {offsets = [56, 0], sizes = [8, 256], strides = [1, 1]} : vector<64x256xf32> to vector<8x256xf32>
    %210 = tpu.concatenate %64, %88, %112, %136, %160, %184, %208, %209 in 0 : vector<8x256xf32>, vector<8x256xf32>, vector<8x256xf32>, vector<8x256xf32>, vector<8x256xf32>, vector<8x256xf32>, vector<8x256xf32>, vector<8x256xf32> -> vector<64x256xf32>
    %c0_42 = arith.constant 0 : index
    %c0_43 = arith.constant 0 : index
    %211 = vector.load %arg7[%c0_42, %c0_43] : memref<32x3xf32, #tpu.memory_space<vmem>>, vector<32x3xf32>
    %c0_44 = arith.constant 0 : index
    %c0_45 = arith.constant 0 : index
    %212 = vector.load %arg6[%c0_44, %c0_45] : memref<32x64xf32, #tpu.memory_space<vmem>>, vector<32x64xf32>
    %cst_46 = arith.constant dense<0.000000e+00> : vector<32x256xf32>
    %213 = tpu.matmul %212, %210, %cst_46 {dimension_numbers = #tpu.dot_dimension_numbers<[1], [0], [0], [1], [0, 0, 1, 1], [], []>} : vector<32x64xf32>, vector<64x256xf32>, vector<32x256xf32> -> vector<32x256xf32>
    %214 = vector.extract_strided_slice %211 {offsets = [0, 0], sizes = [32, 1], strides = [1, 1]} : vector<32x3xf32> to vector<32x1xf32>
    %215 = vector.broadcast %214 : vector<32x1xf32> to vector<32x256xf32>
    %216 = arith.addf %213, %215 : vector<32x256xf32>
    %cst_47 = arith.constant 0.000000e+00 : f32
    %217 = vector.broadcast %cst_47 : f32 to vector<32x256xf32>
    %218 = arith.maximumf %216, %217 : vector<32x256xf32>
    %219 = vector.extract_strided_slice %211 {offsets = [0, 1], sizes = [32, 1], strides = [1, 1]} : vector<32x3xf32> to vector<32x1xf32>
    %220 = vector.broadcast %219 : vector<32x1xf32> to vector<32x256xf32>
    %221 = arith.mulf %218, %220 : vector<32x256xf32>
    %222 = vector.extract_strided_slice %211 {offsets = [0, 2], sizes = [32, 1], strides = [1, 1]} : vector<32x3xf32> to vector<32x1xf32>
    %223 = vector.broadcast %222 : vector<32x1xf32> to vector<32x256xf32>
    %224 = arith.addf %221, %223 : vector<32x256xf32>
    %225 = vector.extract_strided_slice %224 {offsets = [0, 0], sizes = [32, 128], strides = [1, 1]} : vector<32x256xf32> to vector<32x128xf32>
    %cst_48 = arith.constant dense<0.000000e+00> : vector<32xf32>
    %226 = vector.multi_reduction <add>, %225, %cst_48 [1] : vector<32x128xf32> to vector<32xf32>
    %227 = vector.shape_cast %226 : vector<32xf32> to vector<32x1xf32>
    %cst_49 = arith.constant 1.280000e+02 : f32
    %228 = vector.broadcast %cst_49 : f32 to vector<32x1xf32>
    %229 = arith.divf %227, %228 : vector<32x1xf32>
    %230 = vector.extract_strided_slice %224 {offsets = [0, 128], sizes = [32, 128], strides = [1, 1]} : vector<32x256xf32> to vector<32x128xf32>
    %cst_50 = arith.constant dense<0.000000e+00> : vector<32xf32>
    %231 = vector.multi_reduction <add>, %230, %cst_50 [1] : vector<32x128xf32> to vector<32xf32>
    %232 = vector.shape_cast %231 : vector<32xf32> to vector<32x1xf32>
    %cst_51 = arith.constant 1.280000e+02 : f32
    %233 = vector.broadcast %cst_51 : f32 to vector<32x1xf32>
    %234 = arith.divf %232, %233 : vector<32x1xf32>
    %235 = tpu.concatenate %229, %234 in 1 : vector<32x1xf32>, vector<32x1xf32> -> vector<32x2xf32>
    %c0_52 = arith.constant 0 : index
    %c0_53 = arith.constant 0 : index
    %236 = vector.load %arg8[%c0_52, %c0_53] : memref<128x32xf32, #tpu.memory_space<vmem>>, vector<128x32xf32>
    %cst_54 = arith.constant dense<0.000000e+00> : vector<128x2xf32>
    %237 = tpu.matmul %236, %235, %cst_54 {dimension_numbers = #tpu.dot_dimension_numbers<[1], [0], [0], [1], [0, 0, 1, 1], [], []>} : vector<128x32xf32>, vector<32x2xf32>, vector<128x2xf32> -> vector<128x2xf32>
    %c0_55 = arith.constant 0 : index
    %c0_56 = arith.constant 0 : index
    %238 = vector.load %arg9[%c0_55, %c0_56] : memref<128x1xf32, #tpu.memory_space<vmem>>, vector<128x1xf32>
    %239 = vector.broadcast %238 : vector<128x1xf32> to vector<128x2xf32>
    %240 = arith.addf %237, %239 : vector<128x2xf32>
    %cst_57 = arith.constant 0.000000e+00 : f32
    %241 = vector.broadcast %cst_57 : f32 to vector<128x2xf32>
    %242 = arith.maximumf %240, %241 : vector<128x2xf32>
    %c0_58 = arith.constant 0 : index
    %c0_59 = arith.constant 0 : index
    %243 = vector.load %arg10[%c0_58, %c0_59] : memref<32x128xf32, #tpu.memory_space<vmem>>, vector<32x128xf32>
    %cst_60 = arith.constant dense<0.000000e+00> : vector<32x2xf32>
    %244 = tpu.matmul %243, %242, %cst_60 {dimension_numbers = #tpu.dot_dimension_numbers<[1], [0], [0], [1], [0, 0, 1, 1], [], []>} : vector<32x128xf32>, vector<128x2xf32>, vector<32x2xf32> -> vector<32x2xf32>
    %c0_61 = arith.constant 0 : index
    %c0_62 = arith.constant 0 : index
    %245 = vector.load %arg11[%c0_61, %c0_62] : memref<32x1xf32, #tpu.memory_space<vmem>>, vector<32x1xf32>
    %246 = vector.broadcast %245 : vector<32x1xf32> to vector<32x2xf32>
    %247 = arith.addf %244, %246 : vector<32x2xf32>
    %248 = arith.negf %247 : vector<32x2xf32>
    %249 = math.exp %248 : vector<32x2xf32>
    %cst_63 = arith.constant 1.000000e+00 : f32
    %250 = vector.broadcast %cst_63 : f32 to vector<32x2xf32>
    %251 = arith.addf %250, %249 : vector<32x2xf32>
    %252 = arith.divf %250, %251 : vector<32x2xf32>
    %253 = vector.extract_strided_slice %224 {offsets = [0, 0], sizes = [32, 128], strides = [1, 1]} : vector<32x256xf32> to vector<32x128xf32>
    %254 = vector.extract_strided_slice %252 {offsets = [0, 0], sizes = [32, 1], strides = [1, 1]} : vector<32x2xf32> to vector<32x1xf32>
    %255 = vector.broadcast %254 : vector<32x1xf32> to vector<32x128xf32>
    %256 = arith.mulf %253, %255 : vector<32x128xf32>
    %257 = vector.extract_strided_slice %0 {offsets = [0, 0], sizes = [32, 128], strides = [1, 1]} : vector<32x256xf32> to vector<32x128xf32>
    %258 = arith.addf %256, %257 : vector<32x128xf32>
    %c0_64 = arith.constant 0 : index
    %c0_65 = arith.constant 0 : index
    %259 = vector.load %arg12[%c0_64, %c0_65] : memref<32x256xf32, #tpu.memory_space<vmem>>, vector<32x128xf32>
    tpu.vector_store %arg12[%c0_64, %c0_65], %258 {strides = array<i32>} : memref<32x256xf32, #tpu.memory_space<vmem>>, vector<32x128xf32>,
    %260 = vector.extract_strided_slice %224 {offsets = [0, 128], sizes = [32, 128], strides = [1, 1]} : vector<32x256xf32> to vector<32x128xf32>
    %261 = vector.extract_strided_slice %252 {offsets = [0, 1], sizes = [32, 1], strides = [1, 1]} : vector<32x2xf32> to vector<32x1xf32>
    %262 = vector.broadcast %261 : vector<32x1xf32> to vector<32x128xf32>
    %263 = arith.mulf %260, %262 : vector<32x128xf32>
    %264 = vector.extract_strided_slice %0 {offsets = [0, 128], sizes = [32, 128], strides = [1, 1]} : vector<32x256xf32> to vector<32x128xf32>
    %265 = arith.addf %263, %264 : vector<32x128xf32>
    %c0_66 = arith.constant 0 : index
    %c128 = arith.constant 128 : index
    %266 = vector.load %arg12[%c0_66, %c128] : memref<32x256xf32, #tpu.memory_space<vmem>>, vector<32x128xf32>
    tpu.vector_store %arg12[%c0_66, %c128], %265 {strides = array<i32>} : memref<32x256xf32, #tpu.memory_space<vmem>>, vector<32x128xf32>,
    return
  }
  func.func @transform_0(%arg0: i32) -> (i32, i32) {
    %c0_i32 = arith.constant 0 : i32
    %c0_i32_0 = arith.constant 0 : i32
    return %c0_i32, %arg0 : i32, i32
  }
  func.func @transform_1(%arg0: i32) -> (i32, i32) {
    %c0_i32 = arith.constant 0 : i32
    %c0_i32_0 = arith.constant 0 : i32
    %c0_i32_1 = arith.constant 0 : i32
    return %c0_i32, %c0_i32_0 : i32, i32
  }
  func.func @transform_2(%arg0: i32) -> (i32, i32) {
    %c0_i32 = arith.constant 0 : i32
    %c0_i32_0 = arith.constant 0 : i32
    %c0_i32_1 = arith.constant 0 : i32
    return %c0_i32, %c0_i32_0 : i32, i32
  }
  func.func @transform_3(%arg0: i32) -> (i32, i32, i32) {
    %c0_i32 = arith.constant 0 : i32
    %c0_i32_0 = arith.constant 0 : i32
    %c0_i32_1 = arith.constant 0 : i32
    %c0_i32_2 = arith.constant 0 : i32
    return %c0_i32, %c0_i32_0, %c0_i32_1 : i32, i32, i32
  }
  func.func @transform_4(%arg0: i32) -> (i32, i32, i32) {
    %c0_i32 = arith.constant 0 : i32
    %c0_i32_0 = arith.constant 0 : i32
    %c0_i32_1 = arith.constant 0 : i32
    %c0_i32_2 = arith.constant 0 : i32
    return %c0_i32, %c0_i32_0, %c0_i32_1 : i32, i32, i32
  }
  func.func @transform_5(%arg0: i32) -> (i32, i32) {
    %c0_i32 = arith.constant 0 : i32
    %c0_i32_0 = arith.constant 0 : i32
    %c0_i32_1 = arith.constant 0 : i32
    return %c0_i32, %c0_i32_0 : i32, i32
  }
  func.func @transform_6(%arg0: i32) -> (i32, i32) {
    %c0_i32 = arith.constant 0 : i32
    %c0_i32_0 = arith.constant 0 : i32
    %c0_i32_1 = arith.constant 0 : i32
    return %c0_i32, %c0_i32_0 : i32, i32
  }
  func.func @transform_7(%arg0: i32) -> (i32, i32) {
    %c0_i32 = arith.constant 0 : i32
    %c0_i32_0 = arith.constant 0 : i32
    %c0_i32_1 = arith.constant 0 : i32
    return %c0_i32, %c0_i32_0 : i32, i32
  }
  func.func @transform_8(%arg0: i32) -> (i32, i32) {
    %c0_i32 = arith.constant 0 : i32
    %c0_i32_0 = arith.constant 0 : i32
    %c0_i32_1 = arith.constant 0 : i32
    return %c0_i32, %c0_i32_0 : i32, i32
  }
  func.func @transform_9(%arg0: i32) -> (i32, i32) {
    %c0_i32 = arith.constant 0 : i32
    %c0_i32_0 = arith.constant 0 : i32
    %c0_i32_1 = arith.constant 0 : i32
    return %c0_i32, %c0_i32_0 : i32, i32
  }
  func.func @transform_10(%arg0: i32) -> (i32, i32) {
    %c0_i32 = arith.constant 0 : i32
    %c0_i32_0 = arith.constant 0 : i32
    %c0_i32_1 = arith.constant 0 : i32
    return %c0_i32, %c0_i32_0 : i32, i32
  }
  func.func @transform_11(%arg0: i32) -> (i32, i32) {
    %c0_i32 = arith.constant 0 : i32
    %c0_i32_0 = arith.constant 0 : i32
    return %c0_i32, %arg0 : i32, i32
  }
}

</mosaic_0001>

<llo_original>
// kernel: bottle2neck_forward.1
$region0: #{bottle2neck_forward.1}
  #allocation0 [shape = 'u32[]', space=smem, size = 0x4, offset = 0x4, fixed_abs, tag = 'smem constant byte address 0x4 - core index']
  #allocation1 [shape = 'u32[144,128]{1,0:T(1,128)}', space=vmem, size = 0x12000, scoped, tag = 'internal scratch']
  %s0 = inlined_call_operand.vmem [shape: f32[32,512], index: 0, kind: input, shape index: {}]
  %s1 = inlined_call_operand.vmem [shape: f32[64,32], index: 1, kind: input, shape index: {}]
  %s2 = inlined_call_operand.vmem [shape: f32[64,3], index: 2, kind: input, shape index: {}]
  %s3 = inlined_call_operand.vmem [shape: f32[7,8,24], index: 3, kind: input, shape index: {}]
  %s4 = inlined_call_operand.vmem [shape: f32[7,8,3], index: 4, kind: input, shape index: {}]
  %s5 = inlined_call_operand.vmem [shape: f32[32,64], index: 5, kind: input, shape index: {}]
  %s6 = inlined_call_operand.vmem [shape: f32[32,3], index: 6, kind: input, shape index: {}]
  %s7 = inlined_call_operand.vmem [shape: f32[128,32], index: 7, kind: input, shape index: {}]
  %s8 = inlined_call_operand.vmem [shape: f32[128,1], index: 8, kind: input, shape index: {}]
  %s9 = inlined_call_operand.vmem [shape: f32[32,128], index: 9, kind: input, shape index: {}]
  %s10 = inlined_call_operand.vmem [shape: f32[32,1], index: 10, kind: input, shape index: {}]
  %s11 = inlined_call_operand.vmem [shape: f32[32,512], index: 11, kind: output, shape index: {}]
  %s12 = sld [smem:[#allocation0]]
  $region119: #{bottle2neck_forward.1} parent=0
    _
  %s14 = ssub.s32 1, %s12
  %s15 = scalar_select 0, %s14, %s12
  $region1: #{bottle2neck_forward.1} parent=0
    #allocation2 [shape = 'u8[65536]{0}', space=vmem, size = 0x10000, scoped, tag = 'input window, operand 0']
    #allocation3 [shape = 'u8[65536]{0}', space=vmem, size = 0x10000, scoped, tag = 'output window, operand 0']
    loop: start=0, step=1, limit=4
    $region2: #{bottle2neck_forward.1} parent=1 // loop_pre_header
      _
    $region3: #{bottle2neck_forward.1} parent=1 // loop_header
      %s17 = sphi 0, %s21
      %p18 = scmp.ge.s32.totalorder %s17, 4
      %s27 = sphi 0, %s29
      %s30 = sphi 0, %s27
      %s31 = sphi 0, %s30
      %s47 = sphi 0, %s31
      %s51 = sphi 0, %s51
      %s53 = sphi 0, %s51
      %s54 = sphi 0, %s53
      %s68 = sphi 0, %s54
      %s72 = sphi 0, %s72
      %s74 = sphi 0, %s72
      %s75 = sphi 0, %s74
      %s89 = sphi 0, %s75
      %s93 = sphi 0, %s93
      %s95 = sphi 0, %s93
      %s96 = sphi 0, %s95
      %s110 = sphi 0, %s96
      %s114 = sphi 0, %s114
      %s116 = sphi 0, %s114
      %s117 = sphi 0, %s116
      %s131 = sphi 0, %s117
      %s135 = sphi 0, %s135
      %s137 = sphi 0, %s135
      %s138 = sphi 0, %s137
      %s152 = sphi 0, %s138
      %s156 = sphi 0, %s156
      %s158 = sphi 0, %s156
      %s159 = sphi 0, %s158
      %s173 = sphi 0, %s159
      %s177 = sphi 0, %s177
      %s179 = sphi 0, %s177
      %s180 = sphi 0, %s179
      %s194 = sphi 0, %s180
      %s198 = sphi 0, %s198
      %s200 = sphi 0, %s198
      %s201 = sphi 0, %s200
      %s215 = sphi 0, %s201
      %s219 = sphi 0, %s219
      %s221 = sphi 0, %s219
      %s222 = sphi 0, %s221
      %s236 = sphi 0, %s222
      %s240 = sphi 0, %s240
      %s242 = sphi 0, %s240
      %s243 = sphi 0, %s242
      %s257 = sphi 0, %s243
      %s263 = sphi 0, %s265
      %s266 = sphi 0, %s263
      %s267 = sphi 0, %s266
      %s283 = sphi 0, %s267
    $region4: #{bottle2neck_forward.1} parent=1 // loop_header_branch
      %20 = sbr.rel (%p18) target = $region8
    $region5: #{bottle2neck_forward.1} parent=1 // loop_body
      %s22 = ssub.s32 %s17, 1
      %s23 = ssub.s32 %s17, 2
      %s24 = sadd.s32 %s17, 1
      %s25 = ssub.s32 %s17, %s24
      %p26 = scmp.eq.s32.totalorder %s25, 0
      %s28 = sadd.s32 %s27, 1
      %s29 = scalar_select %p26, %s27, %s28
      %p32 = pneg %p26
      %p33 = scmp.eq.s32.totalorder %s17, 1
      %p34 = por %p32, %p33
      %p35 = scmp.ne.s32.totalorder %s27, %s30
      %p36 = scmp.eq.s32.totalorder %s17, 0
      %p37 = por %p35, %p36
      %p38 = scmp.ne.s32.totalorder %s27, %s30
      %p39 = scmp.eq.s32.totalorder %s22, 1
      %p40 = por %p38, %p39
      %p41 = scmp.ne.s32.totalorder %s30, %s31
      %p42 = scmp.eq.s32.totalorder %s22, 0
      %p43 = por %p41, %p42
      %p44 = scmp.ne.s32.totalorder %s30, %s31
      %p45 = scmp.eq.s32.totalorder %s23, 1
      %p46 = por %p44, %p45
      %p48 = scmp.ne.s32.totalorder %s31, %s47
      %p49 = scmp.eq.s32.totalorder %s23, 0
      %p50 = por %p48, %p49
      %s52 = sadd.s32 %s51, 1
      %p55 = scmp.eq.s32.totalorder %s17, 1
      %p56 = scmp.ne.s32.totalorder %s51, %s53
      %p57 = scmp.eq.s32.totalorder %s17, 0
      %p58 = por %p56, %p57
      %p59 = scmp.ne.s32.totalorder %s51, %s53
      %p60 = scmp.eq.s32.totalorder %s22, 1
      %p61 = por %p59, %p60
      %p62 = scmp.ne.s32.totalorder %s53, %s54
      %p63 = scmp.eq.s32.totalorder %s22, 0
      %p64 = por %p62, %p63
      %p65 = scmp.ne.s32.totalorder %s53, %s54
      %p66 = scmp.eq.s32.totalorder %s23, 1
      %p67 = por %p65, %p66
      %p69 = scmp.ne.s32.totalorder %s54, %s68
      %p70 = scmp.eq.s32.totalorder %s23, 0
      %p71 = por %p69, %p70
      %s73 = sadd.s32 %s72, 1
      %p76 = scmp.eq.s32.totalorder %s17, 1
      %p77 = scmp.ne.s32.totalorder %s72, %s74
      %p78 = scmp.eq.s32.totalorder %s17, 0
      %p79 = por %p77, %p78
      %p80 = scmp.ne.s32.totalorder %s72, %s74
      %p81 = scmp.eq.s32.totalorder %s22, 1
      %p82 = por %p80, %p81
      %p83 = scmp.ne.s32.totalorder %s74, %s75
      %p84 = scmp.eq.s32.totalorder %s22, 0
      %p85 = por %p83, %p84
      %p86 = scmp.ne.s32.totalorder %s74, %s75
      %p87 = scmp.eq.s32.totalorder %s23, 1
      %p88 = por %p86, %p87
      %p90 = scmp.ne.s32.totalorder %s75, %s89
      %p91 = scmp.eq.s32.totalorder %s23, 0
      %p92 = por %p90, %p91
      %s94 = sadd.s32 %s93, 1
      %p97 = scmp.eq.s32.totalorder %s17, 1
      %p98 = scmp.ne.s32.totalorder %s93, %s95
      %p99 = scmp.eq.s32.totalorder %s17, 0
      %p100 = por %p98, %p99
      %p101 = scmp.ne.s32.totalorder %s93, %s95
      %p102 = scmp.eq.s32.totalorder %s22, 1
      %p103 = por %p101, %p102
      %p104 = scmp.ne.s32.totalorder %s95, %s96
      %p105 = scmp.eq.s32.totalorder %s22, 0
      %p106 = por %p104, %p105
      %p107 = scmp.ne.s32.totalorder %s95, %s96
      %p108 = scmp.eq.s32.totalorder %s23, 1
      %p109 = por %p107, %p108
      %p111 = scmp.ne.s32.totalorder %s96, %s110
      %p112 = scmp.eq.s32.totalorder %s23, 0
      %p113 = por %p111, %p112
      %s115 = sadd.s32 %s114, 1
      %p118 = scmp.eq.s32.totalorder %s17, 1
      %p119 = scmp.ne.s32.totalorder %s114, %s116
      %p120 = scmp.eq.s32.totalorder %s17, 0
      %p121 = por %p119, %p120
      %p122 = scmp.ne.s32.totalorder %s114, %s116
      %p123 = scmp.eq.s32.totalorder %s22, 1
      %p124 = por %p122, %p123
      %p125 = scmp.ne.s32.totalorder %s116, %s117
      %p126 = scmp.eq.s32.totalorder %s22, 0
      %p127 = por %p125, %p126
      %p128 = scmp.ne.s32.totalorder %s116, %s117
      %p129 = scmp.eq.s32.totalorder %s23, 1
      %p130 = por %p128, %p129
      %p132 = scmp.ne.s32.totalorder %s117, %s131
      %p133 = scmp.eq.s32.totalorder %s23, 0
      %p134 = por %p132, %p133
      %s136 = sadd.s32 %s135, 1
      %p139 = scmp.eq.s32.totalorder %s17, 1
      %p140 = scmp.ne.s32.totalorder %s135, %s137
      %p141 = scmp.eq.s32.totalorder %s17, 0
      %p142 = por %p140, %p141
      %p143 = scmp.ne.s32.totalorder %s135, %s137
      %p144 = scmp.eq.s32.totalorder %s22, 1
      %p145 = por %p143, %p144
      %p146 = scmp.ne.s32.totalorder %s137, %s138
      %p147 = scmp.eq.s32.totalorder %s22, 0
      %p148 = por %p146, %p147
      %p149 = scmp.ne.s32.totalorder %s137, %s138
      %p150 = scmp.eq.s32.totalorder %s23, 1
      %p151 = por %p149, %p150
      %p153 = scmp.ne.s32.totalorder %s138, %s152
      %p154 = scmp.eq.s32.totalorder %s23, 0
      %p155 = por %p153, %p154
      %s157 = sadd.s32 %s156, 1
      %p160 = scmp.eq.s32.totalorder %s17, 1
      %p161 = scmp.ne.s32.totalorder %s156, %s158
      %p162 = scmp.eq.s32.totalorder %s17, 0
      %p163 = por %p161, %p162
      %p164 = scmp.ne.s32.totalorder %s156, %s158
      %p165 = scmp.eq.s32.totalorder %s22, 1
      %p166 = por %p164, %p165
      %p167 = scmp.ne.s32.totalorder %s158, %s159
      %p168 = scmp.eq.s32.totalorder %s22, 0
      %p169 = por %p167, %p168
      %p170 = scmp.ne.s32.totalorder %s158, %s159
      %p171 = scmp.eq.s32.totalorder %s23, 1
      %p172 = por %p170, %p171
      %p174 = scmp.ne.s32.totalorder %s159, %s173
      %p175 = scmp.eq.s32.totalorder %s23, 0
      %p176 = por %p174, %p175
      %s178 = sadd.s32 %s177, 1
      %p181 = scmp.eq.s32.totalorder %s17, 1
      %p182 = scmp.ne.s32.totalorder %s177, %s179
      %p183 = scmp.eq.s32.totalorder %s17, 0
      %p184 = por %p182, %p183
      %p185 = scmp.ne.s32.totalorder %s177, %s179
      %p186 = scmp.eq.s32.totalorder %s22, 1
      %p187 = por %p185, %p186
      %p188 = scmp.ne.s32.totalorder %s179, %s180
      %p189 = scmp.eq.s32.totalorder %s22, 0
      %p190 = por %p188, %p189
      %p191 = scmp.ne.s32.totalorder %s179, %s180
      %p192 = scmp.eq.s32.totalorder %s23, 1
      %p193 = por %p191, %p192
      %p195 = scmp.ne.s32.totalorder %s180, %s194
      %p196 = scmp.eq.s32.totalorder %s23, 0
      %p197 = por %p195, %p196
      %s199 = sadd.s32 %s198, 1
      %p202 = scmp.eq.s32.totalorder %s17, 1
      %p203 = scmp.ne.s32.totalorder %s198, %s200
      %p204 = scmp.eq.s32.totalorder %s17, 0
      %p205 = por %p203, %p204
      %p206 = scmp.ne.s32.totalorder %s198, %s200
      %p207 = scmp.eq.s32.totalorder %s22, 1
      %p208 = por %p206, %p207
      %p209 = scmp.ne.s32.totalorder %s200, %s201
      %p210 = scmp.eq.s32.totalorder %s22, 0
      %p211 = por %p209, %p210
      %p212 = scmp.ne.s32.totalorder %s200, %s201
      %p213 = scmp.eq.s32.totalorder %s23, 1
      %p214 = por %p212, %p213
      %p216 = scmp.ne.s32.totalorder %s201, %s215
      %p217 = scmp.eq.s32.totalorder %s23, 0
      %p218 = por %p216, %p217
      %s220 = sadd.s32 %s219, 1
      %p223 = scmp.eq.s32.totalorder %s17, 1
      %p224 = scmp.ne.s32.totalorder %s219, %s221
      %p225 = scmp.eq.s32.totalorder %s17, 0
      %p226 = por %p224, %p225
      %p227 = scmp.ne.s32.totalorder %s219, %s221
      %p228 = scmp.eq.s32.totalorder %s22, 1
      %p229 = por %p227, %p228
      %p230 = scmp.ne.s32.totalorder %s221, %s222
      %p231 = scmp.eq.s32.totalorder %s22, 0
      %p232 = por %p230, %p231
      %p233 = scmp.ne.s32.totalorder %s221, %s222
      %p234 = scmp.eq.s32.totalorder %s23, 1
      %p235 = por %p233, %p234
      %p237 = scmp.ne.s32.totalorder %s222, %s236
      %p238 = scmp.eq.s32.totalorder %s23, 0
      %p239 = por %p237, %p238
      %s241 = sadd.s32 %s240, 1
      %p244 = scmp.eq.s32.totalorder %s17, 1
      %p245 = scmp.ne.s32.totalorder %s240, %s242
      %p246 = scmp.eq.s32.totalorder %s17, 0
      %p247 = por %p245, %p246
      %p248 = scmp.ne.s32.totalorder %s240, %s242
      %p249 = scmp.eq.s32.totalorder %s22, 1
      %p250 = por %p248, %p249
      %p251 = scmp.ne.s32.totalorder %s242, %s243
      %p252 = scmp.eq.s32.totalorder %s22, 0
      %p253 = por %p251, %p252
      %p254 = scmp.ne.s32.totalorder %s242, %s243
      %p255 = scmp.eq.s32.totalorder %s23, 1
      %p256 = por %p254, %p255
      %p258 = scmp.ne.s32.totalorder %s243, %s257
      %p259 = scmp.eq.s32.totalorder %s23, 0
      %p260 = por %p258, %p259
      %s261 = ssub.s32 %s17, %s24
      %p262 = scmp.eq.s32.totalorder %s261, 0
      %s264 = sadd.s32 %s263, 1
      %s265 = scalar_select %p262, %s263, %s264
      %p268 = pneg %p262
      %p269 = scmp.eq.s32.totalorder %s17, 1
      %p270 = por %p268, %p269
      %p271 = scmp.ne.s32.totalorder %s263, %s266
      %p272 = scmp.eq.s32.totalorder %s17, 0
      %p273 = por %p271, %p272
      %p274 = scmp.ne.s32.totalorder %s263, %s266
      %p275 = scmp.eq.s32.totalorder %s22, 1
      %p276 = por %p274, %p275
      %p277 = scmp.ne.s32.totalorder %s266, %s267
      %p278 = scmp.eq.s32.totalorder %s22, 0
      %p279 = por %p277, %p278
      %p280 = scmp.ne.s32.totalorder %s266, %s267
      %p281 = scmp.eq.s32.totalorder %s23, 1
      %p282 = por %p280, %p281
      %p284 = scmp.ne.s32.totalorder %s267, %s283
      %p285 = scmp.eq.s32.totalorder %s23, 0
      %p286 = por %p284, %p285
      %p287 = scmp.le.s32.totalorder 1, %s17
      %p288 = scmp.lt.s32.totalorder %s17, 3
      %p289 = pnand %p287, %p288
      %p290 = pneg %p289
      // Predicated region
      $region9: #{bottle2neck_forward.1} parent=5 // pred_check
        _
      $region10: #{bottle2neck_forward.1} parent=5 // pred_check_branch
        %292 = sbr.rel (%p289) target = $region12
      $region11: #{bottle2neck_forward.1} parent=5 // pred_region
        %s293 = ssub.s32 %s17, 1
        // Predicated region
        $region13: #{bottle2neck_forward.1} parent=11 // pred_check
          %p294 = pneg %p64
        $region14: #{bottle2neck_forward.1} parent=11 // pred_check_branch
          %296 = sbr.rel (%p294) target = $region16
        $region15: #{bottle2neck_forward.1} parent=11 // pred_region
          _
        $region16: #{bottle2neck_forward.1} parent=11 // pred_fallthru
          _
        // Predicated region
        $region17: #{bottle2neck_forward.1} parent=11 // pred_check
          %p297 = pneg %p85
        $region18: #{bottle2neck_forward.1} parent=11 // pred_check_branch
          %299 = sbr.rel (%p297) target = $region20
        $region19: #{bottle2neck_forward.1} parent=11 // pred_region
          _
        $region20: #{bottle2neck_forward.1} parent=11 // pred_fallthru
          _
        // Predicated region
        $region21: #{bottle2neck_forward.1} parent=11 // pred_check
          %p300 = pneg %p106
        $region22: #{bottle2neck_forward.1} parent=11 // pred_check_branch
          %302 = sbr.rel (%p300) target = $region24
        $region23: #{bottle2neck_forward.1} parent=11 // pred_region
          _
        $region24: #{bottle2neck_forward.1} parent=11 // pred_fallthru
          _
        // Predicated region
        $region25: #{bottle2neck_forward.1} parent=11 // pred_check
          %p303 = pneg %p127
        $region26: #{bottle2neck_forward.1} parent=11 // pred_check_branch
          %305 = sbr.rel (%p303) target = $region28
        $region27: #{bottle2neck_forward.1} parent=11 // pred_region
          _
        $region28: #{bottle2neck_forward.1} parent=11 // pred_fallthru
          _
        // Predicated region
        $region29: #{bottle2neck_forward.1} parent=11 // pred_check
          %p306 = pneg %p148
        $region30: #{bottle2neck_forward.1} parent=11 // pred_check_branch
          %308 = sbr.rel (%p306) target = $region32
        $region31: #{bottle2neck_forward.1} parent=11 // pred_region
          _
        $region32: #{bottle2neck_forward.1} parent=11 // pred_fallthru
          _
        // Predicated region
        $region33: #{bottle2neck_forward.1} parent=11 // pred_check
          %p309 = pneg %p169
        $region34: #{bottle2neck_forward.1} parent=11 // pred_check_branch
          %311 = sbr.rel (%p309) target = $region36
        $region35: #{bottle2neck_forward.1} parent=11 // pred_region
          _
        $region36: #{bottle2neck_forward.1} parent=11 // pred_fallthru
          _
        // Predicated region
        $region37: #{bottle2neck_forward.1} parent=11 // pred_check
          %p312 = pneg %p190
        $region38: #{bottle2neck_forward.1} parent=11 // pred_check_branch
          %314 = sbr.rel (%p312) target = $region40
        $region39: #{bottle2neck_forward.1} parent=11 // pred_region
          _
        $region40: #{bottle2neck_forward.1} parent=11 // pred_fallthru
          _
        // Predicated region
        $region41: #{bottle2neck_forward.1} parent=11 // pred_check
          %p315 = pneg %p211
        $region42: #{bottle2neck_forward.1} parent=11 // pred_check_branch
          %317 = sbr.rel (%p315) target = $region44
        $region43: #{bottle2neck_forward.1} parent=11 // pred_region
          _
        $region44: #{bottle2neck_forward.1} parent=11 // pred_fallthru
          _
        // Predicated region
        $region45: #{bottle2neck_forward.1} parent=11 // pred_check
          %p318 = pneg %p232
        $region46: #{bottle2neck_forward.1} parent=11 // pred_check_branch
          %320 = sbr.rel (%p318) target = $region48
        $region47: #{bottle2neck_forward.1} parent=11 // pred_region
          _
        $region48: #{bottle2neck_forward.1} parent=11 // pred_fallthru
          _
        // Predicated region
        $region49: #{bottle2neck_forward.1} parent=11 // pred_check
          %p321 = pneg %p253
        $region50: #{bottle2neck_forward.1} parent=11 // pred_check_branch
          %323 = sbr.rel (%p321) target = $region52
        $region51: #{bottle2neck_forward.1} parent=11 // pred_region
          _
        $region52: #{bottle2neck_forward.1} parent=11 // pred_fallthru
          _
      $region12: #{bottle2neck_forward.1} parent=5 // pred_fallthru
        _
      %p324 = scmp.lt.s32.totalorder %s17, 2
      // Predicated region
      $region53: #{bottle2neck_forward.1} parent=5 // pred_check
        %p325 = pneg %p324
      $region54: #{bottle2neck_forward.1} parent=5 // pred_check_branch
        %327 = sbr.rel (%p325) target = $region56
      $region55: #{bottle2neck_forward.1} parent=5 // pred_region
        // Predicated region
        $region57: #{bottle2neck_forward.1} parent=55 // pred_check
          %p328 = pneg %p37
        $region58: #{bottle2neck_forward.1} parent=55 // pred_check_branch
          %330 = sbr.rel (%p328) target = $region60
        $region59: #{bottle2neck_forward.1} parent=55 // pred_region
          %s331 = sand.u32 %s27, 1
          %s332 = sand.u32 %s27, 1
          %s333 = smul.addr %s332, 64
          %s334 = scalar_lea.vmem [#allocation2], %s333
          %s335 = smul.u32 2, %s17
          %s336 = smul.addr %s335, 8
          %s337 = scalar_lea.vmem %s0, %s336
          // Predicated region
          $region61: #{bottle2neck_forward.1} parent=59 // pred_check
            _
          $region62: #{bottle2neck_forward.1} parent=59 // pred_check_branch
            %339 = sbr.rel (0) target = $region64
          $region63: #{bottle2neck_forward.1} parent=59 // pred_region
            // Predicated region
            $region65: #{bottle2neck_forward.1} parent=63 // pred_check
              _
            $region66: #{bottle2neck_forward.1} parent=63 // pred_check_branch
              %341 = sbr.rel (0) target = $region68
            $region67: #{bottle2neck_forward.1} parent=63 // pred_region
              loop: start=0, step=1, limit=1
              $region69: #{bottle2neck_forward.1} parent=67 // loop_pre_header
                _
              $region70: #{bottle2neck_forward.1} parent=67 // loop_header
                %s343 = sphi 0, %s347
                %p344 = scmp.ge.s32.totalorder %s343, 1
                %s348 = sphi %s337, %s337
                %s349 = sphi %s334, %s334
              $region71: #{bottle2neck_forward.1} parent=67 // loop_header_branch
                %346 = sbr.rel (%p344) target = $region75
              $region72: #{bottle2neck_forward.1} parent=67 // loop_body
                %v350 = vld [vmem:[%s348] sm:$0xff]
                %351 = vst [vmem:[%s349] sm:$0xff] %v350
                %v352 = vld [vmem:[%s348 + $0x8] sm:$0xff]
                %353 = vst [vmem:[%s349 + $0x8] sm:$0xff] %v352
                %v354 = vld [vmem:[%s348 + $0x20] sm:$0xff]
                %355 = vst [vmem:[%s349 + $0x10] sm:$0xff] %v354
                %v356 = vld [vmem:[%s348 + $0x28] sm:$0xff]
                %357 = vst [vmem:[%s349 + $0x18] sm:$0xff] %v356
                %v358 = vld [vmem:[%s348 + $0x40] sm:$0xff]
                %359 = vst [vmem:[%s349 + $0x20] sm:$0xff] %v358
                %v360 = vld [vmem:[%s348 + $0x48] sm:$0xff]
                %361 = vst [vmem:[%s349 + $0x28] sm:$0xff] %v360
                %v362 = vld [vmem:[%s348 + $0x60] sm:$0xff]
                %363 = vst [vmem:[%s349 + $0x30] sm:$0xff] %v362
                %v364 = vld [vmem:[%s348 + $0x68] sm:$0xff]
                %365 = vst [vmem:[%s349 + $0x38] sm:$0xff] %v364
              $region73: #{bottle2neck_forward.1} parent=67 // loop_footer
                %s347 = sadd.s32 1, %s343
              $region74: #{bottle2neck_forward.1} parent=67 // loop_footer_branch
                %342 = sbr.rel target = $region70
              $region75: #{bottle2neck_forward.1} parent=67 // loop_exit
                _
            $region68: #{bottle2neck_forward.1} parent=63 // pred_fallthru
              _
            // Predicated region
            $region76: #{bottle2neck_forward.1} parent=63 // pred_check
              _
            $region77: #{bottle2neck_forward.1} parent=63 // pred_check_branch
              %367 = sbr.rel target = $region79
            $region78: #{bottle2neck_forward.1} parent=63 // pred_region
              _
            $region79: #{bottle2neck_forward.1} parent=63 // pred_fallthru
              _
          $region64: #{bottle2neck_forward.1} parent=59 // pred_fallthru
            _
          %368 = vnop
        $region60: #{bottle2neck_forward.1} parent=55 // pred_fallthru
          _
      $region56: #{bottle2neck_forward.1} parent=5 // pred_fallthru
        _
      %p369 = scmp.le.s32.totalorder 1, %s17
      %p370 = scmp.lt.s32.totalorder %s17, 3
      %p371 = pnand %p369, %p370
      %p372 = pneg %p371
      // Predicated region
      $region80: #{bottle2neck_forward.1} parent=5 // pred_check
        _
      $region81: #{bottle2neck_forward.1} parent=5 // pred_check_branch
        %374 = sbr.rel (%p371) target = $region83
      $region82: #{bottle2neck_forward.1} parent=5 // pred_region
        %s375 = ssub.s32 %s17, 1
        %s376 = sand.u32 %s30, 1
        %s377 = sand.u32 %s30, 1
        %s378 = smul.addr %s377, 64
        %s379 = scalar_lea.vmem [#allocation2], %s378
        // Predicated region
        $region84: #{bottle2neck_forward.1} parent=82 // pred_check
          %p380 = pneg %p43
        $region85: #{bottle2neck_forward.1} parent=82 // pred_check_branch
          %382 = sbr.rel (%p380) target = $region87
        $region86: #{bottle2neck_forward.1} parent=82 // pred_region
          _
        $region87: #{bottle2neck_forward.1} parent=82 // pred_fallthru
          _
        %s383 = sand.u32 %s30, 1
        %s384 = sand.u32 %s30, 1
        %s385 = smul.addr %s384, 64
        %s386 = scalar_lea.vmem [#allocation2], %s385
        %p387 = pneg %p43
        %p388 = pneg %p40
        %p389 = pneg %p64
        %p390 = pneg %p61
        %p391 = pneg %p85
        %p392 = pneg %p82
        %p393 = pneg %p106
        %p394 = pneg %p103
        %p395 = pneg %p127
        %p396 = pneg %p124
        %p397 = pneg %p148
        %p398 = pneg %p145
        %p399 = pneg %p169
        %p400 = pneg %p166
        %p401 = pneg %p190
        %p402 = pneg %p187
        %p403 = pneg %p211
        %p404 = pneg %p208
        %p405 = pneg %p232
        %p406 = pneg %p229
        %p407 = pneg %p253
        %p408 = pneg %p250
        %p409 = pneg %p279
        %p410 = pneg %p276
        %s411 = sand.u32 %s266, 1
        %s412 = sand.u32 %s266, 1
        %s413 = smul.addr %s412, 64
        %s414 = scalar_lea.vmem [#allocation3], %s413
        %s415 = smul.u32 2, %s22
        %s416 = smul.u32 2, %s22
        %v417 = vld [vmem:[%s379] sm:$0xff]
        %v418 = vld [vmem:[%s379 + $0x8] sm:$0xff]
        %v419 = vld [vmem:[%s379 + $0x10] sm:$0xff]
        %v420 = vld [vmem:[%s379 + $0x18] sm:$0xff]
        %v421 = vld [vmem:[%s379 + $0x20] sm:$0xff]
        %v422 = vld [vmem:[%s379 + $0x28] sm:$0xff]
        %v423 = vld [vmem:[%s379 + $0x30] sm:$0xff]
        %v424 = vld [vmem:[%s379 + $0x38] sm:$0xff]
        %v425 = vld [vmem:[%s2] sm:$0xff]
        %v426 = vld [vmem:[%s2 + $0x8] sm:$0xff]
        %v427 = vld [vmem:[%s2 + $0x10] sm:$0xff]
        %v428 = vld [vmem:[%s2 + $0x18] sm:$0xff]
        %v429 = vld [vmem:[%s2 + $0x20] sm:$0xff]
        %v430 = vld [vmem:[%s2 + $0x28] sm:$0xff]
        %v431 = vld [vmem:[%s2 + $0x30] sm:$0xff]
        %v432 = vld [vmem:[%s2 + $0x38] sm:$0xff]
        %v433 = vld [vmem:[%s1] sm:$0xff]
        %v434 = vld [vmem:[%s1 + $0x8] sm:$0xff]
        %v435 = vld [vmem:[%s1 + $0x10] sm:$0xff]
        %v436 = vld [vmem:[%s1 + $0x18] sm:$0xff]
        %v437 = vld [vmem:[%s1 + $0x20] sm:$0xff]
        %v438 = vld [vmem:[%s1 + $0x28] sm:$0xff]
        %v439 = vld [vmem:[%s1 + $0x30] sm:$0xff]
        %v440 = vld [vmem:[%s1 + $0x38] sm:$0xff]
        %442 = vset.pattern.permute.xlu0 0
        %443 = vperm.xlu0 %442, %v425
        %v444 = vpop.permute.xlu0 %443
        %447 = vset.pattern.permute.xlu0 0
        %448 = vperm.xlu0 %447, %v426
        %v449 = vpop.permute.xlu0 %448
        %452 = vset.pattern.permute.xlu0 0
        %453 = vperm.xlu0 %452, %v427
        %v454 = vpop.permute.xlu0 %453
        %457 = vset.pattern.permute.xlu0 0
        %458 = vperm.xlu0 %457, %v428
        %v459 = vpop.permute.xlu0 %458
        %462 = vset.pattern.permute.xlu0 0
        %463 = vperm.xlu0 %462, %v429
        %v464 = vpop.permute.xlu0 %463
        %467 = vset.pattern.permute.xlu0 0
        %468 = vperm.xlu0 %467, %v430
        %v469 = vpop.permute.xlu0 %468
        %472 = vset.pattern.permute.xlu0 0
        %473 = vperm.xlu0 %472, %v431
        %v474 = vpop.permute.xlu0 %473
        %477 = vset.pattern.permute.xlu0 0
        %478 = vperm.xlu0 %477, %v432
        %v479 = vpop.permute.xlu0 %478
        %vm481 = vcmask 261120
        %v483 = vsel %vm481, %v433, 0
        %v486 = vsel %vm481, %v434, 0
        %v489 = vsel %vm481, %v435, 0
        %v492 = vsel %vm481, %v436, 0
        %v495 = vsel %vm481, %v437, 0
        %v498 = vsel %vm481, %v438, 0
        %v501 = vsel %vm481, %v439, 0
        %v504 = vsel %vm481, %v440, 0
        %506 = vmatprep.subr.mxu0 %v418
        %507 = vmatpush1.msra.mxu0 %v417
        %508 = vmatprep.subr.mxu0 %v420
        %509 = vmatpush1.msra.mxu0 %v419
        %510 = vmatprep.subr.mxu0 %v422
        %511 = vmatpush1.msra.mxu0 %v421
        %512 = vmatprep.subr.mxu0 %v424
        %513 = vmatpush1.msra.mxu0 %v423
        %514 = vmatprep.subr.mxu0 0.0
        %515 = vmatpush1.msra.mxu0 0.0
        %516 = vmatprep.subr.mxu0 0.0
        %517 = vmatpush1.msra.mxu0 0.0
        %518 = vmatprep.subr.mxu0 0.0
        %519 = vmatpush1.msra.mxu0 0.0
        %520 = vmatprep.subr.mxu0 0.0
        %521 = vmatpush1.msra.mxu0 0.0
        %522 = vmatprep.subr.mxu0 0.0
        %523 = vmatpush1.msra.mxu0 0.0
        %524 = vmatprep.subr.mxu0 0.0
        %525 = vmatpush1.msra.mxu0 0.0
        %526 = vmatprep.subr.mxu0 0.0
        %527 = vmatpush1.msra.mxu0 0.0
        %528 = vmatprep.subr.mxu0 0.0
        %529 = vmatpush1.msra.mxu0 0.0
        %530 = vmatprep.subr.mxu0 0.0
        %531 = vmatpush1.msra.mxu0 0.0
        %532 = vmatprep.subr.mxu0 0.0
        %533 = vmatpush1.msra.mxu0 0.0
        %534 = vmatprep.subr.mxu0 0.0
        %535 = vmatpush1.msra.mxu0 0.0
        %536 = vmatprep.subr.mxu0 0.0
        %537 = vmatpush1.msra.mxu0 0.0
        %538 = vmatprep.subr.mxu0 0.0
        %539 = vmatpush1.msra.mxu0 0.0
        %540 = vmatprep.subr.mxu0 0.0
        %541 = vmatpush1.msra.mxu0 0.0
        %542 = vmatprep.subr.mxu0 0.0
        %543 = vmatpush1.msra.mxu0 0.0
        %544 = vmatprep.subr.mxu0 0.0
        %545 = vmatpush1.msra.mxu0 0.0
        %546 = vmatprep.subr.mxu0 0.0
        %547 = vmatpush1.msra.mxu0 0.0
        %548 = vmatprep.subr.mxu0 0.0
        %549 = vmatpush1.msra.mxu0 0.0
        %550 = vmatprep.subr.mxu0 0.0
        %551 = vmatpush1.msra.mxu0 0.0
        %552 = vmatprep.subr.mxu0 0.0
        %553 = vmatpush1.msra.mxu0 0.0
        %554 = vmatprep.subr.mxu0 0.0
        %555 = vmatpush1.msra.mxu0 0.0
        %556 = vmatprep.subr.mxu0 0.0
        %557 = vmatpush1.msra.mxu0 0.0
        %558 = vmatprep.subr.mxu0 0.0
        %559 = vmatpush1.msra.mxu0 0.0
        %560 = vmatprep.subr.mxu0 0.0
        %561 = vmatpush1.msra.mxu0 0.0
        %562 = vmatprep.subr.mxu0 0.0
        %563 = vmatpush1.msra.mxu0 0.0
        %564 = vmatprep.subr.mxu0 0.0
        %565 = vmatpush1.msra.mxu0 0.0
        %566 = vmatprep.subr.mxu0 0.0
        %567 = vmatpush1.msra.mxu0 0.0
        %568 = vmatprep.subr.mxu0 0.0
        %569 = vmatpush1.msra.mxu0 0.0
        %570 = vmatprep.mubr.f32.mxu0 0.0
        %571 = vmatmul.mubr.f32.gmra.mrb[0].mxu0 %v483
        %v572 = vpop.f32.mrb[0].mxu0
        %v573 = vadd.f32 %v444, %v572
        %v574 = vpop.f32.mrb[0].mxu0
        %v575 = vadd.f32 %v444, %v574
        %576 = vmatprep.mubr.f32.mxu0 0.0
        %577 = vmatmul.mubr.f32.gmra.mrb[0].mxu0 %v486
        %v578 = vpop.f32.mrb[0].mxu0
        %v579 = vadd.f32 %v449, %v578
        %v580 = vpop.f32.mrb[0].mxu0
        %v581 = vadd.f32 %v449, %v580
        %582 = vmatprep.mubr.f32.mxu0 0.0
        %583 = vmatmul.mubr.f32.gmra.mrb[0].mxu0 %v489
        %v584 = vpop.f32.mrb[0].mxu0
        %v585 = vadd.f32 %v454, %v584
        %v586 = vpop.f32.mrb[0].mxu0
        %v587 = vadd.f32 %v454, %v586
        %588 = vmatprep.mubr.f32.mxu0 0.0
        %589 = vmatmul.mubr.f32.gmra.mrb[0].mxu0 %v492
        %v590 = vpop.f32.mrb[0].mxu0
        %v591 = vadd.f32 %v459, %v590
        %v592 = vpop.f32.mrb[0].mxu0
        %v593 = vadd.f32 %v459, %v592
        %594 = vmatprep.mubr.f32.mxu0 0.0
        %595 = vmatmul.mubr.f32.gmra.mrb[0].mxu0 %v495
        %v596 = vpop.f32.mrb[0].mxu0
        %v597 = vadd.f32 %v464, %v596
        %v598 = vpop.f32.mrb[0].mxu0
        %v599 = vadd.f32 %v464, %v598
        %600 = vmatprep.mubr.f32.mxu0 0.0
        %601 = vmatmul.mubr.f32.gmra.mrb[0].mxu0 %v498
        %v602 = vpop.f32.mrb[0].mxu0
        %v603 = vadd.f32 %v469, %v602
        %v604 = vpop.f32.mrb[0].mxu0
        %v605 = vadd.f32 %v469, %v604
        %606 = vmatprep.mubr.f32.mxu0 0.0
        %607 = vmatmul.mubr.f32.gmra.mrb[0].mxu0 %v501
        %v608 = vpop.f32.mrb[0].mxu0
        %v609 = vadd.f32 %v474, %v608
        %v610 = vpop.f32.mrb[0].mxu0
        %v611 = vadd.f32 %v474, %v610
        %612 = vmatprep.mubr.f32.mxu0 0.0
        %613 = vmatmul.mubr.f32.gmra.mrb[0].mxu0 %v504
        %v614 = vpop.f32.mrb[0].mxu0
        %v615 = vadd.f32 %v479, %v614
        %v616 = vpop.f32.mrb[0].mxu0
        %v617 = vadd.f32 %v479, %v616
        %618 = vdwg.mxu0
        %v619 = vmax.f32 %v573, 0.0
        %v620 = vmax.f32 %v575, 0.0
        %v621 = vmax.f32 %v579, 0.0
        %v622 = vmax.f32 %v581, 0.0
        %v623 = vmax.f32 %v585, 0.0
        %v624 = vmax.f32 %v587, 0.0
        %v625 = vmax.f32 %v591, 0.0
        %v626 = vmax.f32 %v593, 0.0
        %v627 = vmax.f32 %v597, 0.0
        %v628 = vmax.f32 %v599, 0.0
        %v629 = vmax.f32 %v603, 0.0
        %v630 = vmax.f32 %v605, 0.0
        %v631 = vmax.f32 %v609, 0.0
        %v632 = vmax.f32 %v611, 0.0
        %v633 = vmax.f32 %v615, 0.0
        %v634 = vmax.f32 %v617, 0.0
        %635 = vset.pattern.permute.xlu0 1
        %636 = vperm.xlu0 %635, %v425
        %v637 = vpop.permute.xlu0 %636
        %639 = vset.pattern.permute.xlu0 1
        %640 = vperm.xlu0 %639, %v426
        %v641 = vpop.permute.xlu0 %640
        %643 = vset.pattern.permute.xlu0 1
        %644 = vperm.xlu0 %643, %v427
        %v645 = vpop.permute.xlu0 %644
        %647 = vset.pattern.permute.xlu0 1
        %648 = vperm.xlu0 %647, %v428
        %v649 = vpop.permute.xlu0 %648
        %651 = vset.pattern.permute.xlu0 1
        %652 = vperm.xlu0 %651, %v429
        %v653 = vpop.permute.xlu0 %652
        %655 = vset.pattern.permute.xlu0 1
        %656 = vperm.xlu0 %655, %v430
        %v657 = vpop.permute.xlu0 %656
        %659 = vset.pattern.permute.xlu0 1
        %660 = vperm.xlu0 %659, %v431
        %v661 = vpop.permute.xlu0 %660
        %663 = vset.pattern.permute.xlu0 1
        %664 = vperm.xlu0 %663, %v432
        %v665 = vpop.permute.xlu0 %664
        %v667 = vmul.f32 %v619, %v637
        %v668 = vmul.f32 %v620, %v637
        %v669 = vmul.f32 %v621, %v641
        %v670 = vmul.f32 %v622, %v641
        %v671 = vmul.f32 %v623, %v645
        %v672 = vmul.f32 %v624, %v645
        %v673 = vmul.f32 %v625, %v649
        %v674 = vmul.f32 %v626, %v649
        %v675 = vmul.f32 %v627, %v653
        %v676 = vmul.f32 %v628, %v653
        %v677 = vmul.f32 %v629, %v657
        %v678 = vmul.f32 %v630, %v657
        %v679 = vmul.f32 %v631, %v661
        %v680 = vmul.f32 %v632, %v661
        %v681 = vmul.f32 %v633, %v665
        %v682 = vmul.f32 %v634, %v665
        %683 = vset.pattern.permute.xlu0 2
        %684 = vperm.xlu0 %683, %v425
        %v685 = vpop.permute.xlu0 %684
        %687 = vset.pattern.permute.xlu0 2
        %688 = vperm.xlu0 %687, %v426
        %v689 = vpop.permute.xlu0 %688
        %691 = vset.pattern.permute.xlu0 2
        %692 = vperm.xlu0 %691, %v427
        %v693 = vpop.permute.xlu0 %692
        %695 = vset.pattern.permute.xlu0 2
        %696 = vperm.xlu0 %695, %v428
        %v697 = vpop.permute.xlu0 %696
        %699 = vset.pattern.permute.xlu0 2
        %700 = vperm.xlu0 %699, %v429
        %v701 = vpop.permute.xlu0 %700
        %703 = vset.pattern.permute.xlu0 2
        %704 = vperm.xlu0 %703, %v430
        %v705 = vpop.permute.xlu0 %704
        %707 = vset.pattern.permute.xlu0 2
        %708 = vperm.xlu0 %707, %v431
        %v709 = vpop.permute.xlu0 %708
        %711 = vset.pattern.permute.xlu0 2
        %712 = vperm.xlu0 %711, %v432
        %v713 = vpop.permute.xlu0 %712
        %v715 = vadd.f32 %v667, %v685
        %v716 = vadd.f32 %v668, %v685
        %v717 = vadd.f32 %v669, %v689
        %v718 = vadd.f32 %v670, %v689
        %v719 = vadd.f32 %v671, %v693
        %v720 = vadd.f32 %v672, %v693
        %v721 = vadd.f32 %v673, %v697
        %v722 = vadd.f32 %v674, %v697
        %v723 = vadd.f32 %v675, %v701
        %v724 = vadd.f32 %v676, %v701
        %v725 = vadd.f32 %v677, %v705
        %v726 = vadd.f32 %v678, %v705
        %v727 = vadd.f32 %v679, %v709
        %v728 = vadd.f32 %v680, %v709
        %v729 = vadd.f32 %v681, %v713
        %v730 = vadd.f32 %v682, %v713
        %v731 = vlaneseq
        %v732 = vand.u32 %v731, 127
        %v733 = vadd.s32 %v732, 128
        %vm734 = vcmp.lt.s32.totalorder %v732, 0
        %v735 = vsub.s32 0, %v732
        %v736 = vsel %vm734, %v735, %v732
        %v737 = vshrl.u32 %v736, 7
        %v738 = vand.u32 %v736, 127
        %v739 = vsub.s32 0, %v738
        %v740 = vsel %vm734, %v739, %v738
        %vm741 = vcmp.lt.s32.totalorder %v733, 0
        %v742 = vsub.s32 0, %v733
        %v743 = vsel %vm741, %v742, %v733
        %v744 = vshrl.u32 %v743, 7
        %v745 = vand.u32 %v743, 127
        %v746 = vsub.s32 0, %v745
        %v747 = vsel %vm741, %v746, %v745
        %vm748 = vcmp.ne.s32.totalorder %v740, 0
        %vm749 = vcmp.ne.s32.totalorder %v747, 0
        %vm750 = vcmp.lt.s32.totalorder %v740, 0
        %vm751 = vcmp.lt.s32.totalorder %v747, 0
        %vm752 = vmand %vm750, %vm748
        %vm753 = vmand %vm751, %vm749
        %v754 = vadd.s32 %v740, 128
        %v755 = vadd.s32 %v747, 128
        %v756 = vsel %vm752, %v754, %v740
        %v757 = vsel %vm753, %v755, %v747
        %vm758 = vcmp.ge.s32.totalorder %v756, 2
        %vm759 = vcmp.ge.s32.totalorder %v757, 2
        %v760 = vsel %vm758, 1, 0
        %v761 = vsel %vm759, 1, 0
        %v762 = vcvt.s32.f32 %v760
        %v763 = vcvt.s32.f32 %v761
        %vm764 = vcmp.lt.s32.totalorder %v756, 126
        %vm765 = vcmp.lt.s32.totalorder %v757, 126
        %v766 = vsel %vm764, 1, 0
        %v767 = vsel %vm765, 1, 0
        %v768 = vcvt.s32.f32 %v766
        %v769 = vcvt.s32.f32 %v767
        %v770 = vld [vmem:[%s3] sm:$0xff]
        %v771 = vld [vmem:[%s3 + $0x8] sm:$0xff]
        %v772 = vld [vmem:[%s3 + $0x10] sm:$0xff]
        %v773 = vld [vmem:[%s3 + $0x18] sm:$0xff]
        %v774 = vld [vmem:[%s3 + $0x20] sm:$0xff]
        %v775 = vld [vmem:[%s3 + $0x28] sm:$0xff]
        %v776 = vld [vmem:[%s3 + $0x30] sm:$0xff]
        %v777 = vld [vmem:[%s4] sm:$0xff]
        %v778 = vld [vmem:[%s4 + $0x8] sm:$0xff]
        %v779 = vld [vmem:[%s4 + $0x10] sm:$0xff]
        %v780 = vld [vmem:[%s4 + $0x18] sm:$0xff]
        %v781 = vld [vmem:[%s4 + $0x20] sm:$0xff]
        %v782 = vld [vmem:[%s4 + $0x28] sm:$0xff]
        %v783 = vld [vmem:[%s4 + $0x30] sm:$0xff]
        %784 = vrot.lane.b32.xlu0 %v715, 2
        %v785 = vpop.permute.xlu0 %784
        %786 = vrot.lane.b32.xlu0 %v716, 2
        %v787 = vpop.permute.xlu0 %786
        %vm788 = vcmp.lt.s32.totalorder %v732, 2
        %v789 = vsel %vm788, %v785, %v787
        %v790 = vsel %vm788, %v787, %v785
        %v791 = vmul.f32 %v790, %v762
        %v792 = vmul.f32 %v789, %v763
        %793 = vrot.lane.b32.xlu0 %v715, 126
        %v794 = vpop.permute.xlu0 %793
        %795 = vrot.lane.b32.xlu0 %v716, 126
        %v796 = vpop.permute.xlu0 %795
        %vm797 = vcmp.lt.s32.totalorder %v732, 126
        %v798 = vsel %vm797, %v794, %v796
        %v799 = vsel %vm797, %v796, %v794
        %v800 = vmul.f32 %v798, %v768
        %v801 = vmul.f32 %v799, %v769
        %803 = vset.pattern.permute.xlu0 0
        %804 = vperm.xlu0 %803, %v777
        %v805 = vpop.permute.xlu0 %804
        %vm807 = vcmask 195584
        %v809 = vsel %vm807, %v770, 0
        %811 = vmatprep.subr.mxu0 %v792
        %812 = vmatpush1.msra.mxu0 %v791
        %813 = vmatprep.subr.mxu0 %v716
        %814 = vmatpush1.msra.mxu0 %v715
        %815 = vmatprep.subr.mxu0 %v801
        %816 = vmatpush1.msra.mxu0 %v800
        %817 = vmatprep.subr.mxu0 0.0
        %818 = vmatpush1.msra.mxu0 0.0
        %819 = vmatprep.subr.mxu0 0.0
        %820 = vmatpush1.msra.mxu0 0.0
        %821 = vmatprep.subr.mxu0 0.0
        %822 = vmatpush1.msra.mxu0 0.0
        %823 = vmatprep.subr.mxu0 0.0
        %824 = vmatpush1.msra.mxu0 0.0
        %825 = vmatprep.subr.mxu0 0.0
        %826 = vmatpush1.msra.mxu0 0.0
        %827 = vmatprep.subr.mxu0 0.0
        %828 = vmatpush1.msra.mxu0 0.0
        %829 = vmatprep.subr.mxu0 0.0
        %830 = vmatpush1.msra.mxu0 0.0
        %831 = vmatprep.subr.mxu0 0.0
        %832 = vmatpush1.msra.mxu0 0.0
        %833 = vmatprep.subr.mxu0 0.0
        %834 = vmatpush1.msra.mxu0 0.0
        %835 = vmatprep.subr.mxu0 0.0
        %836 = vmatpush1.msra.mxu0 0.0
        %837 = vmatprep.subr.mxu0 0.0
        %838 = vmatpush1.msra.mxu0 0.0
        %839 = vmatprep.subr.mxu0 0.0
        %840 = vmatpush1.msra.mxu0 0.0
        %841 = vmatprep.subr.mxu0 0.0
        %842 = vmatpush1.msra.mxu0 0.0
        %843 = vmatprep.subr.mxu0 0.0
        %844 = vmatpush1.msra.mxu0 0.0
        %845 = vmatprep.subr.mxu0 0.0
        %846 = vmatpush1.msra.mxu0 0.0
        %847 = vmatprep.subr.mxu0 0.0
        %848 = vmatpush1.msra.mxu0 0.0
        %849 = vmatprep.subr.mxu0 0.0
        %850 = vmatpush1.msra.mxu0 0.0
        %851 = vmatprep.subr.mxu0 0.0
        %852 = vmatpush1.msra.mxu0 0.0
        %853 = vmatprep.subr.mxu0 0.0
        %854 = vmatpush1.msra.mxu0 0.0
        %855 = vmatprep.subr.mxu0 0.0
        %856 = vmatpush1.msra.mxu0 0.0
        %857 = vmatprep.subr.mxu0 0.0
        %858 = vmatpush1.msra.mxu0 0.0
        %859 = vmatprep.subr.mxu0 0.0
        %860 = vmatpush1.msra.mxu0 0.0
        %861 = vmatprep.subr.mxu0 0.0
        %862 = vmatpush1.msra.mxu0 0.0
        %863 = vmatprep.subr.mxu0 0.0
        %864 = vmatpush1.msra.mxu0 0.0
        %865 = vmatprep.subr.mxu0 0.0
        %866 = vmatpush1.msra.mxu0 0.0
        %867 = vmatprep.subr.mxu0 0.0
        %868 = vmatpush1.msra.mxu0 0.0
        %869 = vmatprep.subr.mxu0 0.0
        %870 = vmatpush1.msra.mxu0 0.0
        %871 = vmatprep.subr.mxu0 0.0
        %872 = vmatpush1.msra.mxu0 0.0
        %873 = vmatprep.subr.mxu0 0.0
        %874 = vmatpush1.msra.mxu0 0.0
        %875 = vmatprep.mubr.f32.mxu0 0.0
        %876 = vmatmul.mubr.f32.gmra.mrb[0].mxu0 %v809
        %v877 = vpop.f32.mrb[0].mxu0
        %v878 = vadd.f32 %v805, %v877
        %v879 = vpop.f32.mrb[0].mxu0
        %v880 = vadd.f32 %v805, %v879
        %881 = vdwg.mxu0
        %v882 = vmax.f32 %v878, 0.0
        %v883 = vmax.f32 %v880, 0.0
        %884 = vset.pattern.permute.xlu0 1
        %885 = vperm.xlu0 %884, %v777
        %v886 = vpop.permute.xlu0 %885
        %v888 = vmul.f32 %v882, %v886
        %v889 = vmul.f32 %v883, %v886
        %890 = vset.pattern.permute.xlu0 2
        %891 = vperm.xlu0 %890, %v777
        %v892 = vpop.permute.xlu0 %891
        %v894 = vadd.f32 %v888, %v892
        %v895 = vadd.f32 %v889, %v892
        %v896 = vadd.f32 %v894, %v717
        %v897 = vadd.f32 %v895, %v718
        %898 = vrot.lane.b32.xlu0 %v896, 2
        %v899 = vpop.permute.xlu0 %898
        %900 = vrot.lane.b32.xlu0 %v897, 2
        %v901 = vpop.permute.xlu0 %900
        %v902 = vsel %vm788, %v899, %v901
        %v903 = vsel %vm788, %v901, %v899
        %v904 = vmul.f32 %v903, %v762
        %v905 = vmul.f32 %v902, %v763
        %906 = vrot.lane.b32.xlu0 %v896, 126
        %v907 = vpop.permute.xlu0 %906
        %908 = vrot.lane.b32.xlu0 %v897, 126
        %v909 = vpop.permute.xlu0 %908
        %v910 = vsel %vm797, %v907, %v909
        %v911 = vsel %vm797, %v909, %v907
        %v912 = vmul.f32 %v910, %v768
        %v913 = vmul.f32 %v911, %v769
        %915 = vset.pattern.permute.xlu0 0
        %916 = vperm.xlu0 %915, %v778
        %v917 = vpop.permute.xlu0 %916
        %v920 = vsel %vm807, %v771, 0
        %922 = vmatprep.subr.mxu0 %v905
        %923 = vmatpush1.msra.mxu0 %v904
        %924 = vmatprep.subr.mxu0 %v897
        %925 = vmatpush1.msra.mxu0 %v896
        %926 = vmatprep.subr.mxu0 %v913
        %927 = vmatpush1.msra.mxu0 %v912
        %928 = vmatprep.subr.mxu0 0.0
        %929 = vmatpush1.msra.mxu0 0.0
        %930 = vmatprep.subr.mxu0 0.0
        %931 = vmatpush1.msra.mxu0 0.0
        %932 = vmatprep.subr.mxu0 0.0
        %933 = vmatpush1.msra.mxu0 0.0
        %934 = vmatprep.subr.mxu0 0.0
        %935 = vmatpush1.msra.mxu0 0.0
        %936 = vmatprep.subr.mxu0 0.0
        %937 = vmatpush1.msra.mxu0 0.0
        %938 = vmatprep.subr.mxu0 0.0
        %939 = vmatpush1.msra.mxu0 0.0
        %940 = vmatprep.subr.mxu0 0.0
        %941 = vmatpush1.msra.mxu0 0.0
        %942 = vmatprep.subr.mxu0 0.0
        %943 = vmatpush1.msra.mxu0 0.0
        %944 = vmatprep.subr.mxu0 0.0
        %945 = vmatpush1.msra.mxu0 0.0
        %946 = vmatprep.subr.mxu0 0.0
        %947 = vmatpush1.msra.mxu0 0.0
        %948 = vmatprep.subr.mxu0 0.0
        %949 = vmatpush1.msra.mxu0 0.0
        %950 = vmatprep.subr.mxu0 0.0
        %951 = vmatpush1.msra.mxu0 0.0
        %952 = vmatprep.subr.mxu0 0.0
        %953 = vmatpush1.msra.mxu0 0.0
        %954 = vmatprep.subr.mxu0 0.0
        %955 = vmatpush1.msra.mxu0 0.0
        %956 = vmatprep.subr.mxu0 0.0
        %957 = vmatpush1.msra.mxu0 0.0
        %958 = vmatprep.subr.mxu0 0.0
        %959 = vmatpush1.msra.mxu0 0.0
        %960 = vmatprep.subr.mxu0 0.0
        %961 = vmatpush1.msra.mxu0 0.0
        %962 = vmatprep.subr.mxu0 0.0
        %963 = vmatpush1.msra.mxu0 0.0
        %964 = vmatprep.subr.mxu0 0.0
        %965 = vmatpush1.msra.mxu0 0.0
        %966 = vmatprep.subr.mxu0 0.0
        %967 = vmatpush1.msra.mxu0 0.0
        %968 = vmatprep.subr.mxu0 0.0
        %969 = vmatpush1.msra.mxu0 0.0
        %970 = vmatprep.subr.mxu0 0.0
        %971 = vmatpush1.msra.mxu0 0.0
        %972 = vmatprep.subr.mxu0 0.0
        %973 = vmatpush1.msra.mxu0 0.0
        %974 = vmatprep.subr.mxu0 0.0
        %975 = vmatpush1.msra.mxu0 0.0
        %976 = vmatprep.subr.mxu0 0.0
        %977 = vmatpush1.msra.mxu0 0.0
        %978 = vmatprep.subr.mxu0 0.0
        %979 = vmatpush1.msra.mxu0 0.0
        %980 = vmatprep.subr.mxu0 0.0
        %981 = vmatpush1.msra.mxu0 0.0
        %982 = vmatprep.subr.mxu0 0.0
        %983 = vmatpush1.msra.mxu0 0.0
        %984 = vmatprep.subr.mxu0 0.0
        %985 = vmatpush1.msra.mxu0 0.0
        %986 = vmatprep.mubr.f32.mxu0 0.0
        %987 = vmatmul.mubr.f32.gmra.mrb[0].mxu0 %v920
        %v988 = vpop.f32.mrb[0].mxu0
        %v989 = vadd.f32 %v917, %v988
        %v990 = vpop.f32.mrb[0].mxu0
        %v991 = vadd.f32 %v917, %v990
        %992 = vdwg.mxu0
        %v993 = vmax.f32 %v989, 0.0
        %v994 = vmax.f32 %v991, 0.0
        %995 = vset.pattern.permute.xlu0 1
        %996 = vperm.xlu0 %995, %v778
        %v997 = vpop.permute.xlu0 %996
        %v999 = vmul.f32 %v993, %v997
        %v1000 = vmul.f32 %v994, %v997
        %1001 = vset.pattern.permute.xlu0 2
        %1002 = vperm.xlu0 %1001, %v778
        %v1003 = vpop.permute.xlu0 %1002
        %v1005 = vadd.f32 %v999, %v1003
        %v1006 = vadd.f32 %v1000, %v1003
        %v1007 = vadd.f32 %v1005, %v719
        %v1008 = vadd.f32 %v1006, %v720
        %1009 = vrot.lane.b32.xlu0 %v1007, 2
        %v1010 = vpop.permute.xlu0 %1009
        %1011 = vrot.lane.b32.xlu0 %v1008, 2
        %v1012 = vpop.permute.xlu0 %1011
        %v1013 = vsel %vm788, %v1010, %v1012
        %v1014 = vsel %vm788, %v1012, %v1010
        %v1015 = vmul.f32 %v1014, %v762
        %v1016 = vmul.f32 %v1013, %v763
        %1017 = vrot.lane.b32.xlu0 %v1007, 126
        %v1018 = vpop.permute.xlu0 %1017
        %1019 = vrot.lane.b32.xlu0 %v1008, 126
        %v1020 = vpop.permute.xlu0 %1019
        %v1021 = vsel %vm797, %v1018, %v1020
        %v1022 = vsel %vm797, %v1020, %v1018
        %v1023 = vmul.f32 %v1021, %v768
        %v1024 = vmul.f32 %v1022, %v769
        %1026 = vset.pattern.permute.xlu0 0
        %1027 = vperm.xlu0 %1026, %v779
        %v1028 = vpop.permute.xlu0 %1027
        %v1031 = vsel %vm807, %v772, 0
        %1033 = vmatprep.subr.mxu0 %v1016
        %1034 = vmatpush1.msra.mxu0 %v1015
        %1035 = vmatprep.subr.mxu0 %v1008
        %1036 = vmatpush1.msra.mxu0 %v1007
        %1037 = vmatprep.subr.mxu0 %v1024
        %1038 = vmatpush1.msra.mxu0 %v1023
        %1039 = vmatprep.subr.mxu0 0.0
        %1040 = vmatpush1.msra.mxu0 0.0
        %1041 = vmatprep.subr.mxu0 0.0
        %1042 = vmatpush1.msra.mxu0 0.0
        %1043 = vmatprep.subr.mxu0 0.0
        %1044 = vmatpush1.msra.mxu0 0.0
        %1045 = vmatprep.subr.mxu0 0.0
        %1046 = vmatpush1.msra.mxu0 0.0
        %1047 = vmatprep.subr.mxu0 0.0
        %1048 = vmatpush1.msra.mxu0 0.0
        %1049 = vmatprep.subr.mxu0 0.0
        %1050 = vmatpush1.msra.mxu0 0.0
        %1051 = vmatprep.subr.mxu0 0.0
        %1052 = vmatpush1.msra.mxu0 0.0
        %1053 = vmatprep.subr.mxu0 0.0
        %1054 = vmatpush1.msra.mxu0 0.0
        %1055 = vmatprep.subr.mxu0 0.0
        %1056 = vmatpush1.msra.mxu0 0.0
        %1057 = vmatprep.subr.mxu0 0.0
        %1058 = vmatpush1.msra.mxu0 0.0
        %1059 = vmatprep.subr.mxu0 0.0
        %1060 = vmatpush1.msra.mxu0 0.0
        %1061 = vmatprep.subr.mxu0 0.0
        %1062 = vmatpush1.msra.mxu0 0.0
        %1063 = vmatprep.subr.mxu0 0.0
        %1064 = vmatpush1.msra.mxu0 0.0
        %1065 = vmatprep.subr.mxu0 0.0
        %1066 = vmatpush1.msra.mxu0 0.0
        %1067 = vmatprep.subr.mxu0 0.0
        %1068 = vmatpush1.msra.mxu0 0.0
        %1069 = vmatprep.subr.mxu0 0.0
        %1070 = vmatpush1.msra.mxu0 0.0
        %1071 = vmatprep.subr.mxu0 0.0
        %1072 = vmatpush1.msra.mxu0 0.0
        %1073 = vmatprep.subr.mxu0 0.0
        %1074 = vmatpush1.msra.mxu0 0.0
        %1075 = vmatprep.subr.mxu0 0.0
        %1076 = vmatpush1.msra.mxu0 0.0
        %1077 = vmatprep.subr.mxu0 0.0
        %1078 = vmatpush1.msra.mxu0 0.0
        %1079 = vmatprep.subr.mxu0 0.0
        %1080 = vmatpush1.msra.mxu0 0.0
        %1081 = vmatprep.subr.mxu0 0.0
        %1082 = vmatpush1.msra.mxu0 0.0
        %1083 = vmatprep.subr.mxu0 0.0
        %1084 = vmatpush1.msra.mxu0 0.0
        %1085 = vmatprep.subr.mxu0 0.0
        %1086 = vmatpush1.msra.mxu0 0.0
        %1087 = vmatprep.subr.mxu0 0.0
        %1088 = vmatpush1.msra.mxu0 0.0
        %1089 = vmatprep.subr.mxu0 0.0
        %1090 = vmatpush1.msra.mxu0 0.0
        %1091 = vmatprep.subr.mxu0 0.0
        %1092 = vmatpush1.msra.mxu0 0.0
        %1093 = vmatprep.subr.mxu0 0.0
        %1094 = vmatpush1.msra.mxu0 0.0
        %1095 = vmatprep.subr.mxu0 0.0
        %1096 = vmatpush1.msra.mxu0 0.0
        %1097 = vmatprep.mubr.f32.mxu0 0.0
        %1098 = vmatmul.mubr.f32.gmra.mrb[0].mxu0 %v1031
        %v1099 = vpop.f32.mrb[0].mxu0
        %v1100 = vadd.f32 %v1028, %v1099
        %v1101 = vpop.f32.mrb[0].mxu0
        %v1102 = vadd.f32 %v1028, %v1101
        %1103 = vdwg.mxu0
        %v1104 = vmax.f32 %v1100, 0.0
        %v1105 = vmax.f32 %v1102, 0.0
        %1106 = vset.pattern.permute.xlu0 1
        %1107 = vperm.xlu0 %1106, %v779
        %v1108 = vpop.permute.xlu0 %1107
        %v1110 = vmul.f32 %v1104, %v1108
        %v1111 = vmul.f32 %v1105, %v1108
        %1112 = vset.pattern.permute.xlu0 2
        %1113 = vperm.xlu0 %1112, %v779
        %v1114 = vpop.permute.xlu0 %1113
        %v1116 = vadd.f32 %v1110, %v1114
        %v1117 = vadd.f32 %v1111, %v1114
        %v1118 = vadd.f32 %v1116, %v721
        %v1119 = vadd.f32 %v1117, %v722
        %1120 = vrot.lane.b32.xlu0 %v1118, 2
        %v1121 = vpop.permute.xlu0 %1120
        %1122 = vrot.lane.b32.xlu0 %v1119, 2
        %v1123 = vpop.permute.xlu0 %1122
        %v1124 = vsel %vm788, %v1121, %v1123
        %v1125 = vsel %vm788, %v1123, %v1121
        %v1126 = vmul.f32 %v1125, %v762
        %v1127 = vmul.f32 %v1124, %v763
        %1128 = vrot.lane.b32.xlu0 %v1118, 126
        %v1129 = vpop.permute.xlu0 %1128
        %1130 = vrot.lane.b32.xlu0 %v1119, 126
        %v1131 = vpop.permute.xlu0 %1130
        %v1132 = vsel %vm797, %v1129, %v1131
        %v1133 = vsel %vm797, %v1131, %v1129
        %v1134 = vmul.f32 %v1132, %v768
        %v1135 = vmul.f32 %v1133, %v769
        %1137 = vset.pattern.permute.xlu0 0
        %1138 = vperm.xlu0 %1137, %v780
        %v1139 = vpop.permute.xlu0 %1138
        %v1142 = vsel %vm807, %v773, 0
        %1144 = vmatprep.subr.mxu0 %v1127
        %1145 = vmatpush1.msra.mxu0 %v1126
        %1146 = vmatprep.subr.mxu0 %v1119
        %1147 = vmatpush1.msra.mxu0 %v1118
        %1148 = vmatprep.subr.mxu0 %v1135
        %1149 = vmatpush1.msra.mxu0 %v1134
        %1150 = vmatprep.subr.mxu0 0.0
        %1151 = vmatpush1.msra.mxu0 0.0
        %1152 = vmatprep.subr.mxu0 0.0
        %1153 = vmatpush1.msra.mxu0 0.0
        %1154 = vmatprep.subr.mxu0 0.0
        %1155 = vmatpush1.msra.mxu0 0.0
        %1156 = vmatprep.subr.mxu0 0.0
        %1157 = vmatpush1.msra.mxu0 0.0
        %1158 = vmatprep.subr.mxu0 0.0
        %1159 = vmatpush1.msra.mxu0 0.0
        %1160 = vmatprep.subr.mxu0 0.0
        %1161 = vmatpush1.msra.mxu0 0.0
        %1162 = vmatprep.subr.mxu0 0.0
        %1163 = vmatpush1.msra.mxu0 0.0
        %1164 = vmatprep.subr.mxu0 0.0
        %1165 = vmatpush1.msra.mxu0 0.0
        %1166 = vmatprep.subr.mxu0 0.0
        %1167 = vmatpush1.msra.mxu0 0.0
        %1168 = vmatprep.subr.mxu0 0.0
        %1169 = vmatpush1.msra.mxu0 0.0
        %1170 = vmatprep.subr.mxu0 0.0
        %1171 = vmatpush1.msra.mxu0 0.0
        %1172 = vmatprep.subr.mxu0 0.0
        %1173 = vmatpush1.msra.mxu0 0.0
        %1174 = vmatprep.subr.mxu0 0.0
        %1175 = vmatpush1.msra.mxu0 0.0
        %1176 = vmatprep.subr.mxu0 0.0
        %1177 = vmatpush1.msra.mxu0 0.0
        %1178 = vmatprep.subr.mxu0 0.0
        %1179 = vmatpush1.msra.mxu0 0.0
        %1180 = vmatprep.subr.mxu0 0.0
        %1181 = vmatpush1.msra.mxu0 0.0
        %1182 = vmatprep.subr.mxu0 0.0
        %1183 = vmatpush1.msra.mxu0 0.0
        %1184 = vmatprep.subr.mxu0 0.0
        %1185 = vmatpush1.msra.mxu0 0.0
        %1186 = vmatprep.subr.mxu0 0.0
        %1187 = vmatpush1.msra.mxu0 0.0
        %1188 = vmatprep.subr.mxu0 0.0
        %1189 = vmatpush1.msra.mxu0 0.0
        %1190 = vmatprep.subr.mxu0 0.0
        %1191 = vmatpush1.msra.mxu0 0.0
        %1192 = vmatprep.subr.mxu0 0.0
        %1193 = vmatpush1.msra.mxu0 0.0
        %1194 = vmatprep.subr.mxu0 0.0
        %1195 = vmatpush1.msra.mxu0 0.0
        %1196 = vmatprep.subr.mxu0 0.0
        %1197 = vmatpush1.msra.mxu0 0.0
        %1198 = vmatprep.subr.mxu0 0.0
        %1199 = vmatpush1.msra.mxu0 0.0
        %1200 = vmatprep.subr.mxu0 0.0
        %1201 = vmatpush1.msra.mxu0 0.0
        %1202 = vmatprep.subr.mxu0 0.0
        %1203 = vmatpush1.msra.mxu0 0.0
        %1204 = vmatprep.subr.mxu0 0.0
        %1205 = vmatpush1.msra.mxu0 0.0
        %1206 = vmatprep.subr.mxu0 0.0
        %1207 = vmatpush1.msra.mxu0 0.0
        %1208 = vmatprep.mubr.f32.mxu0 0.0
        %1209 = vmatmul.mubr.f32.gmra.mrb[0].mxu0 %v1142
        %v1210 = vpop.f32.mrb[0].mxu0
        %v1211 = vadd.f32 %v1139, %v1210
        %v1212 = vpop.f32.mrb[0].mxu0
        %v1213 = vadd.f32 %v1139, %v1212
        %1214 = vdwg.mxu0
        %v1215 = vmax.f32 %v1211, 0.0
        %v1216 = vmax.f32 %v1213, 0.0
        %1217 = vset.pattern.permute.xlu0 1
        %1218 = vperm.xlu0 %1217, %v780
        %v1219 = vpop.permute.xlu0 %1218
        %v1221 = vmul.f32 %v1215, %v1219
        %v1222 = vmul.f32 %v1216, %v1219
        %1223 = vset.pattern.permute.xlu0 2
        %1224 = vperm.xlu0 %1223, %v780
        %v1225 = vpop.permute.xlu0 %1224
        %v1227 = vadd.f32 %v1221, %v1225
        %v1228 = vadd.f32 %v1222, %v1225
        %v1229 = vadd.f32 %v1227, %v723
        %v1230 = vadd.f32 %v1228, %v724
        %1231 = vrot.lane.b32.xlu0 %v1229, 2
        %v1232 = vpop.permute.xlu0 %1231
        %1233 = vrot.lane.b32.xlu0 %v1230, 2
        %v1234 = vpop.permute.xlu0 %1233
        %v1235 = vsel %vm788, %v1232, %v1234
        %v1236 = vsel %vm788, %v1234, %v1232
        %v1237 = vmul.f32 %v1236, %v762
        %v1238 = vmul.f32 %v1235, %v763
        %1239 = vrot.lane.b32.xlu0 %v1229, 126
        %v1240 = vpop.permute.xlu0 %1239
        %1241 = vrot.lane.b32.xlu0 %v1230, 126
        %v1242 = vpop.permute.xlu0 %1241
        %v1243 = vsel %vm797, %v1240, %v1242
        %v1244 = vsel %vm797, %v1242, %v1240
        %v1245 = vmul.f32 %v1243, %v768
        %v1246 = vmul.f32 %v1244, %v769
        %1248 = vset.pattern.permute.xlu0 0
        %1249 = vperm.xlu0 %1248, %v781
        %v1250 = vpop.permute.xlu0 %1249
        %v1253 = vsel %vm807, %v774, 0
        %1255 = vmatprep.subr.mxu0 %v1238
        %1256 = vmatpush1.msra.mxu0 %v1237
        %1257 = vmatprep.subr.mxu0 %v1230
        %1258 = vmatpush1.msra.mxu0 %v1229
        %1259 = vmatprep.subr.mxu0 %v1246
        %1260 = vmatpush1.msra.mxu0 %v1245
        %1261 = vmatprep.subr.mxu0 0.0
        %1262 = vmatpush1.msra.mxu0 0.0
        %1263 = vmatprep.subr.mxu0 0.0
        %1264 = vmatpush1.msra.mxu0 0.0
        %1265 = vmatprep.subr.mxu0 0.0
        %1266 = vmatpush1.msra.mxu0 0.0
        %1267 = vmatprep.subr.mxu0 0.0
        %1268 = vmatpush1.msra.mxu0 0.0
        %1269 = vmatprep.subr.mxu0 0.0
        %1270 = vmatpush1.msra.mxu0 0.0
        %1271 = vmatprep.subr.mxu0 0.0
        %1272 = vmatpush1.msra.mxu0 0.0
        %1273 = vmatprep.subr.mxu0 0.0
        %1274 = vmatpush1.msra.mxu0 0.0
        %1275 = vmatprep.subr.mxu0 0.0
        %1276 = vmatpush1.msra.mxu0 0.0
        %1277 = vmatprep.subr.mxu0 0.0
        %1278 = vmatpush1.msra.mxu0 0.0
        %1279 = vmatprep.subr.mxu0 0.0
        %1280 = vmatpush1.msra.mxu0 0.0
        %1281 = vmatprep.subr.mxu0 0.0
        %1282 = vmatpush1.msra.mxu0 0.0
        %1283 = vmatprep.subr.mxu0 0.0
        %1284 = vmatpush1.msra.mxu0 0.0
        %1285 = vmatprep.subr.mxu0 0.0
        %1286 = vmatpush1.msra.mxu0 0.0
        %1287 = vmatprep.subr.mxu0 0.0
        %1288 = vmatpush1.msra.mxu0 0.0
        %1289 = vmatprep.subr.mxu0 0.0
        %1290 = vmatpush1.msra.mxu0 0.0
        %1291 = vmatprep.subr.mxu0 0.0
        %1292 = vmatpush1.msra.mxu0 0.0
        %1293 = vmatprep.subr.mxu0 0.0
        %1294 = vmatpush1.msra.mxu0 0.0
        %1295 = vmatprep.subr.mxu0 0.0
        %1296 = vmatpush1.msra.mxu0 0.0
        %1297 = vmatprep.subr.mxu0 0.0
        %1298 = vmatpush1.msra.mxu0 0.0
        %1299 = vmatprep.subr.mxu0 0.0
        %1300 = vmatpush1.msra.mxu0 0.0
        %1301 = vmatprep.subr.mxu0 0.0
        %1302 = vmatpush1.msra.mxu0 0.0
        %1303 = vmatprep.subr.mxu0 0.0
        %1304 = vmatpush1.msra.mxu0 0.0
        %1305 = vmatprep.subr.mxu0 0.0
        %1306 = vmatpush1.msra.mxu0 0.0
        %1307 = vmatprep.subr.mxu0 0.0
        %1308 = vmatpush1.msra.mxu0 0.0
        %1309 = vmatprep.subr.mxu0 0.0
        %1310 = vmatpush1.msra.mxu0 0.0
        %1311 = vmatprep.subr.mxu0 0.0
        %1312 = vmatpush1.msra.mxu0 0.0
        %1313 = vmatprep.subr.mxu0 0.0
        %1314 = vmatpush1.msra.mxu0 0.0
        %1315 = vmatprep.subr.mxu0 0.0
        %1316 = vmatpush1.msra.mxu0 0.0
        %1317 = vmatprep.subr.mxu0 0.0
        %1318 = vmatpush1.msra.mxu0 0.0
        %1319 = vmatprep.mubr.f32.mxu0 0.0
        %1320 = vmatmul.mubr.f32.gmra.mrb[0].mxu0 %v1253
        %v1321 = vpop.f32.mrb[0].mxu0
        %v1322 = vadd.f32 %v1250, %v1321
        %v1323 = vpop.f32.mrb[0].mxu0
        %v1324 = vadd.f32 %v1250, %v1323
        %1325 = vdwg.mxu0
        %v1326 = vmax.f32 %v1322, 0.0
        %v1327 = vmax.f32 %v1324, 0.0
        %1328 = vset.pattern.permute.xlu0 1
        %1329 = vperm.xlu0 %1328, %v781
        %v1330 = vpop.permute.xlu0 %1329
        %v1332 = vmul.f32 %v1326, %v1330
        %v1333 = vmul.f32 %v1327, %v1330
        %1334 = vset.pattern.permute.xlu0 2
        %1335 = vperm.xlu0 %1334, %v781
        %v1336 = vpop.permute.xlu0 %1335
        %v1338 = vadd.f32 %v1332, %v1336
        %v1339 = vadd.f32 %v1333, %v1336
        %v1340 = vadd.f32 %v1338, %v725
        %v1341 = vadd.f32 %v1339, %v726
        %1342 = vrot.lane.b32.xlu0 %v1340, 2
        %v1343 = vpop.permute.xlu0 %1342
        %1344 = vrot.lane.b32.xlu0 %v1341, 2
        %v1345 = vpop.permute.xlu0 %1344
        %v1346 = vsel %vm788, %v1343, %v1345
        %v1347 = vsel %vm788, %v1345, %v1343
        %v1348 = vmul.f32 %v1347, %v762
        %v1349 = vmul.f32 %v1346, %v763
        %1350 = vrot.lane.b32.xlu0 %v1340, 126
        %v1351 = vpop.permute.xlu0 %1350
        %1352 = vrot.lane.b32.xlu0 %v1341, 126
        %v1353 = vpop.permute.xlu0 %1352
        %v1354 = vsel %vm797, %v1351, %v1353
        %v1355 = vsel %vm797, %v1353, %v1351
        %v1356 = vmul.f32 %v1354, %v768
        %v1357 = vmul.f32 %v1355, %v769
        %1359 = vset.pattern.permute.xlu0 0
        %1360 = vperm.xlu0 %1359, %v782
        %v1361 = vpop.permute.xlu0 %1360
        %v1364 = vsel %vm807, %v775, 0
        %1366 = vmatprep.subr.mxu0 %v1349
        %1367 = vmatpush1.msra.mxu0 %v1348
        %1368 = vmatprep.subr.mxu0 %v1341
        %1369 = vmatpush1.msra.mxu0 %v1340
        %1370 = vmatprep.subr.mxu0 %v1357
        %1371 = vmatpush1.msra.mxu0 %v1356
        %1372 = vmatprep.subr.mxu0 0.0
        %1373 = vmatpush1.msra.mxu0 0.0
        %1374 = vmatprep.subr.mxu0 0.0
        %1375 = vmatpush1.msra.mxu0 0.0
        %1376 = vmatprep.subr.mxu0 0.0
        %1377 = vmatpush1.msra.mxu0 0.0
        %1378 = vmatprep.subr.mxu0 0.0
        %1379 = vmatpush1.msra.mxu0 0.0
        %1380 = vmatprep.subr.mxu0 0.0
        %1381 = vmatpush1.msra.mxu0 0.0
        %1382 = vmatprep.subr.mxu0 0.0
        %1383 = vmatpush1.msra.mxu0 0.0
        %1384 = vmatprep.subr.mxu0 0.0
        %1385 = vmatpush1.msra.mxu0 0.0
        %1386 = vmatprep.subr.mxu0 0.0
        %1387 = vmatpush1.msra.mxu0 0.0
        %1388 = vmatprep.subr.mxu0 0.0
        %1389 = vmatpush1.msra.mxu0 0.0
        %1390 = vmatprep.subr.mxu0 0.0
        %1391 = vmatpush1.msra.mxu0 0.0
        %1392 = vmatprep.subr.mxu0 0.0
        %1393 = vmatpush1.msra.mxu0 0.0
        %1394 = vmatprep.subr.mxu0 0.0
        %1395 = vmatpush1.msra.mxu0 0.0
        %1396 = vmatprep.subr.mxu0 0.0
        %1397 = vmatpush1.msra.mxu0 0.0
        %1398 = vmatprep.subr.mxu0 0.0
        %1399 = vmatpush1.msra.mxu0 0.0
        %1400 = vmatprep.subr.mxu0 0.0
        %1401 = vmatpush1.msra.mxu0 0.0
        %1402 = vmatprep.subr.mxu0 0.0
        %1403 = vmatpush1.msra.mxu0 0.0
        %1404 = vmatprep.subr.mxu0 0.0
        %1405 = vmatpush1.msra.mxu0 0.0
        %1406 = vmatprep.subr.mxu0 0.0
        %1407 = vmatpush1.msra.mxu0 0.0
        %1408 = vmatprep.subr.mxu0 0.0
        %1409 = vmatpush1.msra.mxu0 0.0
        %1410 = vmatprep.subr.mxu0 0.0
        %1411 = vmatpush1.msra.mxu0 0.0
        %1412 = vmatprep.subr.mxu0 0.0
        %1413 = vmatpush1.msra.mxu0 0.0
        %1414 = vmatprep.subr.mxu0 0.0
        %1415 = vmatpush1.msra.mxu0 0.0
        %1416 = vmatprep.subr.mxu0 0.0
        %1417 = vmatpush1.msra.mxu0 0.0
        %1418 = vmatprep.subr.mxu0 0.0
        %1419 = vmatpush1.msra.mxu0 0.0
        %1420 = vmatprep.subr.mxu0 0.0
        %1421 = vmatpush1.msra.mxu0 0.0
        %1422 = vmatprep.subr.mxu0 0.0
        %1423 = vmatpush1.msra.mxu0 0.0
        %1424 = vmatprep.subr.mxu0 0.0
        %1425 = vmatpush1.msra.mxu0 0.0
        %1426 = vmatprep.subr.mxu0 0.0
        %1427 = vmatpush1.msra.mxu0 0.0
        %1428 = vmatprep.subr.mxu0 0.0
        %1429 = vmatpush1.msra.mxu0 0.0
        %1430 = vmatprep.mubr.f32.mxu0 0.0
        %1431 = vmatmul.mubr.f32.gmra.mrb[0].mxu0 %v1364
        %v1432 = vpop.f32.mrb[0].mxu0
        %v1433 = vadd.f32 %v1361, %v1432
        %v1434 = vpop.f32.mrb[0].mxu0
        %v1435 = vadd.f32 %v1361, %v1434
        %1436 = vdwg.mxu0
        %v1437 = vmax.f32 %v1433, 0.0
        %v1438 = vmax.f32 %v1435, 0.0
        %1439 = vset.pattern.permute.xlu0 1
        %1440 = vperm.xlu0 %1439, %v782
        %v1441 = vpop.permute.xlu0 %1440
        %v1443 = vmul.f32 %v1437, %v1441
        %v1444 = vmul.f32 %v1438, %v1441
        %1445 = vset.pattern.permute.xlu0 2
        %1446 = vperm.xlu0 %1445, %v782
        %v1447 = vpop.permute.xlu0 %1446
        %v1449 = vadd.f32 %v1443, %v1447
        %v1450 = vadd.f32 %v1444, %v1447
        %v1451 = vadd.f32 %v1449, %v727
        %v1452 = vadd.f32 %v1450, %v728
        %1453 = vrot.lane.b32.xlu0 %v1451, 2
        %v1454 = vpop.permute.xlu0 %1453
        %1455 = vrot.lane.b32.xlu0 %v1452, 2
        %v1456 = vpop.permute.xlu0 %1455
        %v1457 = vsel %vm788, %v1454, %v1456
        %v1458 = vsel %vm788, %v1456, %v1454
        %v1459 = vmul.f32 %v1458, %v762
        %v1460 = vmul.f32 %v1457, %v763
        %1461 = vrot.lane.b32.xlu0 %v1451, 126
        %v1462 = vpop.permute.xlu0 %1461
        %1463 = vrot.lane.b32.xlu0 %v1452, 126
        %v1464 = vpop.permute.xlu0 %1463
        %v1465 = vsel %vm797, %v1462, %v1464
        %v1466 = vsel %vm797, %v1464, %v1462
        %v1467 = vmul.f32 %v1465, %v768
        %v1468 = vmul.f32 %v1466, %v769
        %1470 = vset.pattern.permute.xlu0 0
        %1471 = vperm.xlu0 %1470, %v783
        %v1472 = vpop.permute.xlu0 %1471
        %v1475 = vsel %vm807, %v776, 0
        %1477 = vmatprep.subr.mxu0 %v1460
        %1478 = vmatpush1.msra.mxu0 %v1459
        %1479 = vmatprep.subr.mxu0 %v1452
        %1480 = vmatpush1.msra.mxu0 %v1451
        %1481 = vmatprep.subr.mxu0 %v1468
        %1482 = vmatpush1.msra.mxu0 %v1467
        %1483 = vmatprep.subr.mxu0 0.0
        %1484 = vmatpush1.msra.mxu0 0.0
        %1485 = vmatprep.subr.mxu0 0.0
        %1486 = vmatpush1.msra.mxu0 0.0
        %1487 = vmatprep.subr.mxu0 0.0
        %1488 = vmatpush1.msra.mxu0 0.0
        %1489 = vmatprep.subr.mxu0 0.0
        %1490 = vmatpush1.msra.mxu0 0.0
        %1491 = vmatprep.subr.mxu0 0.0
        %1492 = vmatpush1.msra.mxu0 0.0
        %1493 = vmatprep.subr.mxu0 0.0
        %1494 = vmatpush1.msra.mxu0 0.0
        %1495 = vmatprep.subr.mxu0 0.0
        %1496 = vmatpush1.msra.mxu0 0.0
        %1497 = vmatprep.subr.mxu0 0.0
        %1498 = vmatpush1.msra.mxu0 0.0
        %1499 = vmatprep.subr.mxu0 0.0
        %1500 = vmatpush1.msra.mxu0 0.0
        %1501 = vmatprep.subr.mxu0 0.0
        %1502 = vmatpush1.msra.mxu0 0.0
        %1503 = vmatprep.subr.mxu0 0.0
        %1504 = vmatpush1.msra.mxu0 0.0
        %1505 = vmatprep.subr.mxu0 0.0
        %1506 = vmatpush1.msra.mxu0 0.0
        %1507 = vmatprep.subr.mxu0 0.0
        %1508 = vmatpush1.msra.mxu0 0.0
        %1509 = vmatprep.subr.mxu0 0.0
        %1510 = vmatpush1.msra.mxu0 0.0
        %1511 = vmatprep.subr.mxu0 0.0
        %1512 = vmatpush1.msra.mxu0 0.0
        %1513 = vmatprep.subr.mxu0 0.0
        %1514 = vmatpush1.msra.mxu0 0.0
        %1515 = vmatprep.subr.mxu0 0.0
        %1516 = vmatpush1.msra.mxu0 0.0
        %1517 = vmatprep.subr.mxu0 0.0
        %1518 = vmatpush1.msra.mxu0 0.0
        %1519 = vmatprep.subr.mxu0 0.0
        %1520 = vmatpush1.msra.mxu0 0.0
        %1521 = vmatprep.subr.mxu0 0.0
        %1522 = vmatpush1.msra.mxu0 0.0
        %1523 = vmatprep.subr.mxu0 0.0
        %1524 = vmatpush1.msra.mxu0 0.0
        %1525 = vmatprep.subr.mxu0 0.0
        %1526 = vmatpush1.msra.mxu0 0.0
        %1527 = vmatprep.subr.mxu0 0.0
        %1528 = vmatpush1.msra.mxu0 0.0
        %1529 = vmatprep.subr.mxu0 0.0
        %1530 = vmatpush1.msra.mxu0 0.0
        %1531 = vmatprep.subr.mxu0 0.0
        %1532 = vmatpush1.msra.mxu0 0.0
        %1533 = vmatprep.subr.mxu0 0.0
        %1534 = vmatpush1.msra.mxu0 0.0
        %1535 = vmatprep.subr.mxu0 0.0
        %1536 = vmatpush1.msra.mxu0 0.0
        %1537 = vmatprep.subr.mxu0 0.0
        %1538 = vmatpush1.msra.mxu0 0.0
        %1539 = vmatprep.subr.mxu0 0.0
        %1540 = vmatpush1.msra.mxu0 0.0
        %1541 = vmatprep.mubr.f32.mxu0 0.0
        %1542 = vmatmul.mubr.f32.gmra.mrb[0].mxu0 %v1475
        %v1543 = vpop.f32.mrb[0].mxu0
        %v1544 = vadd.f32 %v1472, %v1543
        %v1545 = vpop.f32.mrb[0].mxu0
        %v1546 = vadd.f32 %v1472, %v1545
        %1547 = vdwg.mxu0
        %v1548 = vmax.f32 %v1544, 0.0
        %v1549 = vmax.f32 %v1546, 0.0
        %1550 = vset.pattern.permute.xlu0 1
        %1551 = vperm.xlu0 %1550, %v783
        %v1552 = vpop.permute.xlu0 %1551
        %v1554 = vmul.f32 %v1548, %v1552
        %v1555 = vmul.f32 %v1549, %v1552
        %1556 = vset.pattern.permute.xlu0 2
        %1557 = vperm.xlu0 %1556, %v783
        %v1558 = vpop.permute.xlu0 %1557
        %v1560 = vadd.f32 %v1554, %v1558
        %v1561 = vadd.f32 %v1555, %v1558
        %v1562 = vld [vmem:[%s6] sm:$0xff]
        %v1563 = vld [vmem:[%s6 + $0x8] sm:$0xff]
        %v1564 = vld [vmem:[%s6 + $0x10] sm:$0xff]
        %v1565 = vld [vmem:[%s6 + $0x18] sm:$0xff]
        %v1566 = vld [vmem:[%s5] sm:$0xff]
        %v1567 = vld [vmem:[%s5 + $0x8] sm:$0xff]
        %v1568 = vld [vmem:[%s5 + $0x10] sm:$0xff]
        %v1569 = vld [vmem:[%s5 + $0x18] sm:$0xff]
        %1571 = vset.pattern.permute.xlu0 0
        %1572 = vperm.xlu0 %1571, %v1562
        %v1573 = vpop.permute.xlu0 %1572
        %1576 = vset.pattern.permute.xlu0 0
        %1577 = vperm.xlu0 %1576, %v1563
        %v1578 = vpop.permute.xlu0 %1577
        %1581 = vset.pattern.permute.xlu0 0
        %1582 = vperm.xlu0 %1581, %v1564
        %v1583 = vpop.permute.xlu0 %1582
        %1586 = vset.pattern.permute.xlu0 0
        %1587 = vperm.xlu0 %1586, %v1565
        %v1588 = vpop.permute.xlu0 %1587
        %vm1590 = vcmask 523264
        %v1592 = vsel %vm1590, %v1566, 0
        %v1595 = vsel %vm1590, %v1567, 0
        %v1598 = vsel %vm1590, %v1568, 0
        %v1601 = vsel %vm1590, %v1569, 0
        %1603 = vmatprep.subr.mxu0 %v895
        %1604 = vmatpush1.msra.mxu0 %v894
        %1605 = vmatprep.subr.mxu0 %v1006
        %1606 = vmatpush1.msra.mxu0 %v1005
        %1607 = vmatprep.subr.mxu0 %v1117
        %1608 = vmatpush1.msra.mxu0 %v1116
        %1609 = vmatprep.subr.mxu0 %v1228
        %1610 = vmatpush1.msra.mxu0 %v1227
        %1611 = vmatprep.subr.mxu0 %v1339
        %1612 = vmatpush1.msra.mxu0 %v1338
        %1613 = vmatprep.subr.mxu0 %v1450
        %1614 = vmatpush1.msra.mxu0 %v1449
        %1615 = vmatprep.subr.mxu0 %v1561
        %1616 = vmatpush1.msra.mxu0 %v1560
        %1617 = vmatprep.subr.mxu0 %v730
        %1618 = vmatpush1.msra.mxu0 %v729
        %1619 = vmatprep.subr.mxu0 0.0
        %1620 = vmatpush1.msra.mxu0 0.0
        %1621 = vmatprep.subr.mxu0 0.0
        %1622 = vmatpush1.msra.mxu0 0.0
        %1623 = vmatprep.subr.mxu0 0.0
        %1624 = vmatpush1.msra.mxu0 0.0
        %1625 = vmatprep.subr.mxu0 0.0
        %1626 = vmatpush1.msra.mxu0 0.0
        %1627 = vmatprep.subr.mxu0 0.0
        %1628 = vmatpush1.msra.mxu0 0.0
        %1629 = vmatprep.subr.mxu0 0.0
        %1630 = vmatpush1.msra.mxu0 0.0
        %1631 = vmatprep.subr.mxu0 0.0
        %1632 = vmatpush1.msra.mxu0 0.0
        %1633 = vmatprep.subr.mxu0 0.0
        %1634 = vmatpush1.msra.mxu0 0.0
        %1635 = vmatprep.subr.mxu0 0.0
        %1636 = vmatpush1.msra.mxu0 0.0
        %1637 = vmatprep.subr.mxu0 0.0
        %1638 = vmatpush1.msra.mxu0 0.0
        %1639 = vmatprep.subr.mxu0 0.0
        %1640 = vmatpush1.msra.mxu0 0.0
        %1641 = vmatprep.subr.mxu0 0.0
        %1642 = vmatpush1.msra.mxu0 0.0
        %1643 = vmatprep.subr.mxu0 0.0
        %1644 = vmatpush1.msra.mxu0 0.0
        %1645 = vmatprep.subr.mxu0 0.0
        %1646 = vmatpush1.msra.mxu0 0.0
        %1647 = vmatprep.subr.mxu0 0.0
        %1648 = vmatpush1.msra.mxu0 0.0
        %1649 = vmatprep.subr.mxu0 0.0
        %1650 = vmatpush1.msra.mxu0 0.0
        %1651 = vmatprep.subr.mxu0 0.0
        %1652 = vmatpush1.msra.mxu0 0.0
        %1653 = vmatprep.subr.mxu0 0.0
        %1654 = vmatpush1.msra.mxu0 0.0
        %1655 = vmatprep.subr.mxu0 0.0
        %1656 = vmatpush1.msra.mxu0 0.0
        %1657 = vmatprep.subr.mxu0 0.0
        %1658 = vmatpush1.msra.mxu0 0.0
        %1659 = vmatprep.subr.mxu0 0.0
        %1660 = vmatpush1.msra.mxu0 0.0
        %1661 = vmatprep.subr.mxu0 0.0
        %1662 = vmatpush1.msra.mxu0 0.0
        %1663 = vmatprep.subr.mxu0 0.0
        %1664 = vmatpush1.msra.mxu0 0.0
        %1665 = vmatprep.subr.mxu0 0.0
        %1666 = vmatpush1.msra.mxu0 0.0
        %1667 = vmatprep.mubr.f32.mxu0 0.0
        %1668 = vmatmul.mubr.f32.gmra.mrb[0].mxu0 %v1592
        %v1669 = vpop.f32.mrb[0].mxu0
        %v1670 = vadd.f32 %v1573, %v1669
        %v1671 = vpop.f32.mrb[0].mxu0
        %v1672 = vadd.f32 %v1573, %v1671
        %1673 = vmatprep.mubr.f32.mxu0 0.0
        %1674 = vmatmul.mubr.f32.gmra.mrb[0].mxu0 %v1595
        %v1675 = vpop.f32.mrb[0].mxu0
        %v1676 = vadd.f32 %v1578, %v1675
        %v1677 = vpop.f32.mrb[0].mxu0
        %v1678 = vadd.f32 %v1578, %v1677
        %1679 = vmatprep.mubr.f32.mxu0 0.0
        %1680 = vmatmul.mubr.f32.gmra.mrb[0].mxu0 %v1598
        %v1681 = vpop.f32.mrb[0].mxu0
        %v1682 = vadd.f32 %v1583, %v1681
        %v1683 = vpop.f32.mrb[0].mxu0
        %v1684 = vadd.f32 %v1583, %v1683
        %1685 = vmatprep.mubr.f32.mxu0 0.0
        %1686 = vmatmul.mubr.f32.gmra.mrb[0].mxu0 %v1601
        %v1687 = vpop.f32.mrb[0].mxu0
        %v1688 = vadd.f32 %v1588, %v1687
        %v1689 = vpop.f32.mrb[0].mxu0
        %v1690 = vadd.f32 %v1588, %v1689
        %1691 = vdwg.mxu0
        %v1692 = vmax.f32 %v1670, 0.0
        %v1693 = vmax.f32 %v1672, 0.0
        %v1694 = vmax.f32 %v1676, 0.0
        %v1695 = vmax.f32 %v1678, 0.0
        %v1696 = vmax.f32 %v1682, 0.0
        %v1697 = vmax.f32 %v1684, 0.0
        %v1698 = vmax.f32 %v1688, 0.0
        %v1699 = vmax.f32 %v1690, 0.0
        %1700 = vset.pattern.permute.xlu0 1
        %1701 = vperm.xlu0 %1700, %v1562
        %v1702 = vpop.permute.xlu0 %1701
        %1704 = vset.pattern.permute.xlu0 1
        %1705 = vperm.xlu0 %1704, %v1563
        %v1706 = vpop.permute.xlu0 %1705
        %1708 = vset.pattern.permute.xlu0 1
        %1709 = vperm.xlu0 %1708, %v1564
        %v1710 = vpop.permute.xlu0 %1709
        %1712 = vset.pattern.permute.xlu0 1
        %1713 = vperm.xlu0 %1712, %v1565
        %v1714 = vpop.permute.xlu0 %1713
        %v1716 = vmul.f32 %v1692, %v1702
        %v1717 = vmul.f32 %v1693, %v1702
        %v1718 = vmul.f32 %v1694, %v1706
        %v1719 = vmul.f32 %v1695, %v1706
        %v1720 = vmul.f32 %v1696, %v1710
        %v1721 = vmul.f32 %v1697, %v1710
        %v1722 = vmul.f32 %v1698, %v1714
        %v1723 = vmul.f32 %v1699, %v1714
        %1724 = vset.pattern.permute.xlu0 2
        %1725 = vperm.xlu0 %1724, %v1562
        %v1726 = vpop.permute.xlu0 %1725
        %1728 = vset.pattern.permute.xlu0 2
        %1729 = vperm.xlu0 %1728, %v1563
        %v1730 = vpop.permute.xlu0 %1729
        %1732 = vset.pattern.permute.xlu0 2
        %1733 = vperm.xlu0 %1732, %v1564
        %v1734 = vpop.permute.xlu0 %1733
        %1736 = vset.pattern.permute.xlu0 2
        %1737 = vperm.xlu0 %1736, %v1565
        %v1738 = vpop.permute.xlu0 %1737
        %v1740 = vadd.f32 %v1716, %v1726
        %v1741 = vadd.f32 %v1717, %v1726
        %v1742 = vadd.f32 %v1718, %v1730
        %v1743 = vadd.f32 %v1719, %v1730
        %v1744 = vadd.f32 %v1720, %v1734
        %v1745 = vadd.f32 %v1721, %v1734
        %v1746 = vadd.f32 %v1722, %v1738
        %v1747 = vadd.f32 %v1723, %v1738
        %1748 = vadd.xlane.f32.xlu0 %v1740
        %v1749 = vpop.xlane.xlu0 %1748
        %1750 = vadd.xlane.f32.xlu0 %v1742
        %v1751 = vpop.xlane.xlu0 %1750
        %1752 = vadd.xlane.f32.xlu0 %v1744
        %v1753 = vpop.xlane.xlu0 %1752
        %1754 = vadd.xlane.f32.xlu0 %v1746
        %v1755 = vpop.xlane.xlu0 %1754
        %v1756 = vrcp.pop 128.0
        %v1757 = vmul.f32 %v1749, %v1756
        %v1758 = vmul.f32 %v1751, %v1756
        %v1759 = vmul.f32 %v1753, %v1756
        %v1760 = vmul.f32 %v1755, %v1756
        %1761 = vadd.xlane.f32.xlu0 %v1741
        %v1762 = vpop.xlane.xlu0 %1761
        %1763 = vadd.xlane.f32.xlu0 %v1743
        %v1764 = vpop.xlane.xlu0 %1763
        %1765 = vadd.xlane.f32.xlu0 %v1745
        %v1766 = vpop.xlane.xlu0 %1765
        %1767 = vadd.xlane.f32.xlu0 %v1747
        %v1768 = vpop.xlane.xlu0 %1767
        %v1769 = vmul.f32 %v1762, %v1756
        %v1770 = vmul.f32 %v1764, %v1756
        %v1771 = vmul.f32 %v1766, %v1756
        %v1772 = vmul.f32 %v1768, %v1756
        %vm1773 = vcmask 7168
        %v1774 = vsel %vm1773, %v1757, %v1769
        %v1775 = vsel %vm1773, %v1758, %v1770
        %v1776 = vsel %vm1773, %v1759, %v1771
        %v1777 = vsel %vm1773, %v1760, %v1772
        %v1778 = vld [vmem:[%s7] sm:$0xff]
        %v1779 = vld [vmem:[%s7 + $0x8] sm:$0xff]
        %v1780 = vld [vmem:[%s7 + $0x10] sm:$0xff]
        %v1781 = vld [vmem:[%s7 + $0x18] sm:$0xff]
        %v1782 = vld [vmem:[%s7 + $0x20] sm:$0xff]
        %v1783 = vld [vmem:[%s7 + $0x28] sm:$0xff]
        %v1784 = vld [vmem:[%s7 + $0x30] sm:$0xff]
        %v1785 = vld [vmem:[%s7 + $0x38] sm:$0xff]
        %v1786 = vld [vmem:[%s7 + $0x40] sm:$0xff]
        %v1787 = vld [vmem:[%s7 + $0x48] sm:$0xff]
        %v1788 = vld [vmem:[%s7 + $0x50] sm:$0xff]
        %v1789 = vld [vmem:[%s7 + $0x58] sm:$0xff]
        %v1790 = vld [vmem:[%s7 + $0x60] sm:$0xff]
        %v1791 = vld [vmem:[%s7 + $0x68] sm:$0xff]
        %v1792 = vld [vmem:[%s7 + $0x70] sm:$0xff]
        %v1793 = vld [vmem:[%s7 + $0x78] sm:$0xff]
        %v1794 = vld [vmem:[%s8] sm:$0xff]
        %v1795 = vld [vmem:[%s8 + $0x8] sm:$0xff]
        %v1796 = vld [vmem:[%s8 + $0x10] sm:$0xff]
        %v1797 = vld [vmem:[%s8 + $0x18] sm:$0xff]
        %v1798 = vld [vmem:[%s8 + $0x20] sm:$0xff]
        %v1799 = vld [vmem:[%s8 + $0x28] sm:$0xff]
        %v1800 = vld [vmem:[%s8 + $0x30] sm:$0xff]
        %v1801 = vld [vmem:[%s8 + $0x38] sm:$0xff]
        %v1802 = vld [vmem:[%s8 + $0x40] sm:$0xff]
        %v1803 = vld [vmem:[%s8 + $0x48] sm:$0xff]
        %v1804 = vld [vmem:[%s8 + $0x50] sm:$0xff]
        %v1805 = vld [vmem:[%s8 + $0x58] sm:$0xff]
        %v1806 = vld [vmem:[%s8 + $0x60] sm:$0xff]
        %v1807 = vld [vmem:[%s8 + $0x68] sm:$0xff]
        %v1808 = vld [vmem:[%s8 + $0x70] sm:$0xff]
        %v1809 = vld [vmem:[%s8 + $0x78] sm:$0xff]
        %1811 = vset.pattern.permute.xlu0 0
        %1812 = vperm.xlu0 %1811, %v1794
        %v1813 = vpop.permute.xlu0 %1812
        %1816 = vset.pattern.permute.xlu0 0
        %1817 = vperm.xlu0 %1816, %v1795
        %v1818 = vpop.permute.xlu0 %1817
        %1821 = vset.pattern.permute.xlu0 0
        %1822 = vperm.xlu0 %1821, %v1796
        %v1823 = vpop.permute.xlu0 %1822
        %1826 = vset.pattern.permute.xlu0 0
        %1827 = vperm.xlu0 %1826, %v1797
        %v1828 = vpop.permute.xlu0 %1827
        %1831 = vset.pattern.permute.xlu0 0
        %1832 = vperm.xlu0 %1831, %v1798
        %v1833 = vpop.permute.xlu0 %1832
        %1836 = vset.pattern.permute.xlu0 0
        %1837 = vperm.xlu0 %1836, %v1799
        %v1838 = vpop.permute.xlu0 %1837
        %1841 = vset.pattern.permute.xlu0 0
        %1842 = vperm.xlu0 %1841, %v1800
        %v1843 = vpop.permute.xlu0 %1842
        %1846 = vset.pattern.permute.xlu0 0
        %1847 = vperm.xlu0 %1846, %v1801
        %v1848 = vpop.permute.xlu0 %1847
        %1851 = vset.pattern.permute.xlu0 0
        %1852 = vperm.xlu0 %1851, %v1802
        %v1853 = vpop.permute.xlu0 %1852
        %1856 = vset.pattern.permute.xlu0 0
        %1857 = vperm.xlu0 %1856, %v1803
        %v1858 = vpop.permute.xlu0 %1857
        %1861 = vset.pattern.permute.xlu0 0
        %1862 = vperm.xlu0 %1861, %v1804
        %v1863 = vpop.permute.xlu0 %1862
        %1866 = vset.pattern.permute.xlu0 0
        %1867 = vperm.xlu0 %1866, %v1805
        %v1868 = vpop.permute.xlu0 %1867
        %1871 = vset.pattern.permute.xlu0 0
        %1872 = vperm.xlu0 %1871, %v1806
        %v1873 = vpop.permute.xlu0 %1872
        %1876 = vset.pattern.permute.xlu0 0
        %1877 = vperm.xlu0 %1876, %v1807
        %v1878 = vpop.permute.xlu0 %1877
        %1881 = vset.pattern.permute.xlu0 0
        %1882 = vperm.xlu0 %1881, %v1808
        %v1883 = vpop.permute.xlu0 %1882
        %1886 = vset.pattern.permute.xlu0 0
        %1887 = vperm.xlu0 %1886, %v1809
        %v1888 = vpop.permute.xlu0 %1887
        %v1891 = vsel %vm481, %v1778, 0
        %v1894 = vsel %vm481, %v1779, 0
        %v1897 = vsel %vm481, %v1780, 0
        %v1900 = vsel %vm481, %v1781, 0
        %v1903 = vsel %vm481, %v1782, 0
        %v1906 = vsel %vm481, %v1783, 0
        %v1909 = vsel %vm481, %v1784, 0
        %v1912 = vsel %vm481, %v1785, 0
        %v1915 = vsel %vm481, %v1786, 0
        %v1918 = vsel %vm481, %v1787, 0
        %v1921 = vsel %vm481, %v1788, 0
        %v1924 = vsel %vm481, %v1789, 0
        %v1927 = vsel %vm481, %v1790, 0
        %v1930 = vsel %vm481, %v1791, 0
        %v1933 = vsel %vm481, %v1792, 0
        %v1936 = vsel %vm481, %v1793, 0
        %1938 = vmatprep.subr.mxu0 0.0
        %1939 = vmatpush1.msra.mxu0 %v1774
        %1940 = vmatprep.subr.mxu0 0.0
        %1941 = vmatpush1.msra.mxu0 %v1775
        %1942 = vmatprep.subr.mxu0 0.0
        %1943 = vmatpush1.msra.mxu0 %v1776
        %1944 = vmatprep.subr.mxu0 0.0
        %1945 = vmatpush1.msra.mxu0 %v1777
        %1946 = vmatprep.subr.mxu0 0.0
        %1947 = vmatpush1.msra.mxu0 0.0
        %1948 = vmatprep.subr.mxu0 0.0
        %1949 = vmatpush1.msra.mxu0 0.0
        %1950 = vmatprep.subr.mxu0 0.0
        %1951 = vmatpush1.msra.mxu0 0.0
        %1952 = vmatprep.subr.mxu0 0.0
        %1953 = vmatpush1.msra.mxu0 0.0
        %1954 = vmatprep.subr.mxu0 0.0
        %1955 = vmatpush1.msra.mxu0 0.0
        %1956 = vmatprep.subr.mxu0 0.0
        %1957 = vmatpush1.msra.mxu0 0.0
        %1958 = vmatprep.subr.mxu0 0.0
        %1959 = vmatpush1.msra.mxu0 0.0
        %1960 = vmatprep.subr.mxu0 0.0
        %1961 = vmatpush1.msra.mxu0 0.0
        %1962 = vmatprep.subr.mxu0 0.0
        %1963 = vmatpush1.msra.mxu0 0.0
        %1964 = vmatprep.subr.mxu0 0.0
        %1965 = vmatpush1.msra.mxu0 0.0
        %1966 = vmatprep.subr.mxu0 0.0
        %1967 = vmatpush1.msra.mxu0 0.0
        %1968 = vmatprep.subr.mxu0 0.0
        %1969 = vmatpush1.msra.mxu0 0.0
        %1970 = vmatprep.subr.mxu0 0.0
        %1971 = vmatpush1.msra.mxu0 0.0
        %1972 = vmatprep.subr.mxu0 0.0
        %1973 = vmatpush1.msra.mxu0 0.0
        %1974 = vmatprep.subr.mxu0 0.0
        %1975 = vmatpush1.msra.mxu0 0.0
        %1976 = vmatprep.subr.mxu0 0.0
        %1977 = vmatpush1.msra.mxu0 0.0
        %1978 = vmatprep.subr.mxu0 0.0
        %1979 = vmatpush1.msra.mxu0 0.0
        %1980 = vmatprep.subr.mxu0 0.0
        %1981 = vmatpush1.msra.mxu0 0.0
        %1982 = vmatprep.subr.mxu0 0.0
        %1983 = vmatpush1.msra.mxu0 0.0
        %1984 = vmatprep.subr.mxu0 0.0
        %1985 = vmatpush1.msra.mxu0 0.0
        %1986 = vmatprep.subr.mxu0 0.0
        %1987 = vmatpush1.msra.mxu0 0.0
        %1988 = vmatprep.subr.mxu0 0.0
        %1989 = vmatpush1.msra.mxu0 0.0
        %1990 = vmatprep.subr.mxu0 0.0
        %1991 = vmatpush1.msra.mxu0 0.0
        %1992 = vmatprep.subr.mxu0 0.0
        %1993 = vmatpush1.msra.mxu0 0.0
        %1994 = vmatprep.subr.mxu0 0.0
        %1995 = vmatpush1.msra.mxu0 0.0
        %1996 = vmatprep.subr.mxu0 0.0
        %1997 = vmatpush1.msra.mxu0 0.0
        %1998 = vmatprep.subr.mxu0 0.0
        %1999 = vmatpush1.msra.mxu0 0.0
        %2000 = vmatprep.subr.mxu0 0.0
        %2001 = vmatpush1.msra.mxu0 0.0
        %2002 = vmatprep.mubr.f32.mxu0 0.0
        %2003 = vmatmul.mubr.f32.gmra.mrb[0].mxu0 %v1891
        %v2004 = vpop.f32.mrb[0].mxu0
        %v2005 = vadd.f32 %v1813, %v2004
        %v2006 = vpop.f32.mrb[0].mxu0
        %2007 = vmatprep.mubr.f32.mxu0 0.0
        %2008 = vmatmul.mubr.f32.gmra.mrb[0].mxu0 %v1894
        %v2009 = vpop.f32.mrb[0].mxu0
        %v2010 = vadd.f32 %v1818, %v2009
        %v2011 = vpop.f32.mrb[0].mxu0
        %2012 = vmatprep.mubr.f32.mxu0 0.0
        %2013 = vmatmul.mubr.f32.gmra.mrb[0].mxu0 %v1897
        %v2014 = vpop.f32.mrb[0].mxu0
        %v2015 = vadd.f32 %v1823, %v2014
        %v2016 = vpop.f32.mrb[0].mxu0
        %2017 = vmatprep.mubr.f32.mxu0 0.0
        %2018 = vmatmul.mubr.f32.gmra.mrb[0].mxu0 %v1900
        %v2019 = vpop.f32.mrb[0].mxu0
        %v2020 = vadd.f32 %v1828, %v2019
        %v2021 = vpop.f32.mrb[0].mxu0
        %2022 = vmatprep.mubr.f32.mxu0 0.0
        %2023 = vmatmul.mubr.f32.gmra.mrb[0].mxu0 %v1903
        %v2024 = vpop.f32.mrb[0].mxu0
        %v2025 = vadd.f32 %v1833, %v2024
        %v2026 = vpop.f32.mrb[0].mxu0
        %2027 = vmatprep.mubr.f32.mxu0 0.0
        %2028 = vmatmul.mubr.f32.gmra.mrb[0].mxu0 %v1906
        %v2029 = vpop.f32.mrb[0].mxu0
        %v2030 = vadd.f32 %v1838, %v2029
        %v2031 = vpop.f32.mrb[0].mxu0
        %2032 = vmatprep.mubr.f32.mxu0 0.0
        %2033 = vmatmul.mubr.f32.gmra.mrb[0].mxu0 %v1909
        %v2034 = vpop.f32.mrb[0].mxu0
        %v2035 = vadd.f32 %v1843, %v2034
        %v2036 = vpop.f32.mrb[0].mxu0
        %2037 = vmatprep.mubr.f32.mxu0 0.0
        %2038 = vmatmul.mubr.f32.gmra.mrb[0].mxu0 %v1912
        %v2039 = vpop.f32.mrb[0].mxu0
        %v2040 = vadd.f32 %v1848, %v2039
        %v2041 = vpop.f32.mrb[0].mxu0
        %2042 = vmatprep.mubr.f32.mxu0 0.0
        %2043 = vmatmul.mubr.f32.gmra.mrb[0].mxu0 %v1915
        %v2044 = vpop.f32.mrb[0].mxu0
        %v2045 = vadd.f32 %v1853, %v2044
        %v2046 = vpop.f32.mrb[0].mxu0
        %2047 = vmatprep.mubr.f32.mxu0 0.0
        %2048 = vmatmul.mubr.f32.gmra.mrb[0].mxu0 %v1918
        %v2049 = vpop.f32.mrb[0].mxu0
        %v2050 = vadd.f32 %v1858, %v2049
        %v2051 = vpop.f32.mrb[0].mxu0
        %2052 = vmatprep.mubr.f32.mxu0 0.0
        %2053 = vmatmul.mubr.f32.gmra.mrb[0].mxu0 %v1921
        %v2054 = vpop.f32.mrb[0].mxu0
        %v2055 = vadd.f32 %v1863, %v2054
        %v2056 = vpop.f32.mrb[0].mxu0
        %2057 = vmatprep.mubr.f32.mxu0 0.0
        %2058 = vmatmul.mubr.f32.gmra.mrb[0].mxu0 %v1924
        %v2059 = vpop.f32.mrb[0].mxu0
        %v2060 = vadd.f32 %v1868, %v2059
        %v2061 = vpop.f32.mrb[0].mxu0
        %2062 = vmatprep.mubr.f32.mxu0 0.0
        %2063 = vmatmul.mubr.f32.gmra.mrb[0].mxu0 %v1927
        %v2064 = vpop.f32.mrb[0].mxu0
        %v2065 = vadd.f32 %v1873, %v2064
        %v2066 = vpop.f32.mrb[0].mxu0
        %2067 = vmatprep.mubr.f32.mxu0 0.0
        %2068 = vmatmul.mubr.f32.gmra.mrb[0].mxu0 %v1930
        %v2069 = vpop.f32.mrb[0].mxu0
        %v2070 = vadd.f32 %v1878, %v2069
        %v2071 = vpop.f32.mrb[0].mxu0
        %2072 = vmatprep.mubr.f32.mxu0 0.0
        %2073 = vmatmul.mubr.f32.gmra.mrb[0].mxu0 %v1933
        %v2074 = vpop.f32.mrb[0].mxu0
        %v2075 = vadd.f32 %v1883, %v2074
        %v2076 = vpop.f32.mrb[0].mxu0
        %2077 = vmatprep.mubr.f32.mxu0 0.0
        %2078 = vmatmul.mubr.f32.gmra.mrb[0].mxu0 %v1936
        %v2079 = vpop.f32.mrb[0].mxu0
        %v2080 = vadd.f32 %v1888, %v2079
        %v2081 = vpop.f32.mrb[0].mxu0
        %2082 = vdwg.mxu0
        %v2083 = vmax.f32 %v2005, 0.0
        %v2084 = vmax.f32 %v2010, 0.0
        %v2085 = vmax.f32 %v2015, 0.0
        %v2086 = vmax.f32 %v2020, 0.0
        %v2087 = vmax.f32 %v2025, 0.0
        %v2088 = vmax.f32 %v2030, 0.0
        %v2089 = vmax.f32 %v2035, 0.0
        %v2090 = vmax.f32 %v2040, 0.0
        %v2091 = vmax.f32 %v2045, 0.0
        %v2092 = vmax.f32 %v2050, 0.0
        %v2093 = vmax.f32 %v2055, 0.0
        %v2094 = vmax.f32 %v2060, 0.0
        %v2095 = vmax.f32 %v2065, 0.0
        %v2096 = vmax.f32 %v2070, 0.0
        %v2097 = vmax.f32 %v2075, 0.0
        %v2098 = vmax.f32 %v2080, 0.0
        %v2099 = vld [vmem:[%s9] sm:$0xff]
        %v2100 = vld [vmem:[%s9 + $0x8] sm:$0xff]
        %v2101 = vld [vmem:[%s9 + $0x10] sm:$0xff]
        %v2102 = vld [vmem:[%s9 + $0x18] sm:$0xff]
        %v2103 = vld [vmem:[%s10] sm:$0xff]
        %v2104 = vld [vmem:[%s10 + $0x8] sm:$0xff]
        %v2105 = vld [vmem:[%s10 + $0x10] sm:$0xff]
        %v2106 = vld [vmem:[%s10 + $0x18] sm:$0xff]
        %2108 = vset.pattern.permute.xlu0 0
        %2109 = vperm.xlu0 %2108, %v2103
        %v2110 = vpop.permute.xlu0 %2109
        %2113 = vset.pattern.permute.xlu0 0
        %2114 = vperm.xlu0 %2113, %v2104
        %v2115 = vpop.permute.xlu0 %2114
        %2118 = vset.pattern.permute.xlu0 0
        %2119 = vperm.xlu0 %2118, %v2105
        %v2120 = vpop.permute.xlu0 %2119
        %2123 = vset.pattern.permute.xlu0 0
        %2124 = vperm.xlu0 %2123, %v2106
        %v2125 = vpop.permute.xlu0 %2124
        %2127 = vmatprep.subr.mxu0 0.0
        %2128 = vmatpush1.msra.mxu0 %v2083
        %2129 = vmatprep.subr.mxu0 0.0
        %2130 = vmatpush1.msra.mxu0 %v2084
        %2131 = vmatprep.subr.mxu0 0.0
        %2132 = vmatpush1.msra.mxu0 %v2085
        %2133 = vmatprep.subr.mxu0 0.0
        %2134 = vmatpush1.msra.mxu0 %v2086
        %2135 = vmatprep.subr.mxu0 0.0
        %2136 = vmatpush1.msra.mxu0 %v2087
        %2137 = vmatprep.subr.mxu0 0.0
        %2138 = vmatpush1.msra.mxu0 %v2088
        %2139 = vmatprep.subr.mxu0 0.0
        %2140 = vmatpush1.msra.mxu0 %v2089
        %2141 = vmatprep.subr.mxu0 0.0
        %2142 = vmatpush1.msra.mxu0 %v2090
        %2143 = vmatprep.subr.mxu0 0.0
        %2144 = vmatpush1.msra.mxu0 %v2091
        %2145 = vmatprep.subr.mxu0 0.0
        %2146 = vmatpush1.msra.mxu0 %v2092
        %2147 = vmatprep.subr.mxu0 0.0
        %2148 = vmatpush1.msra.mxu0 %v2093
        %2149 = vmatprep.subr.mxu0 0.0
        %2150 = vmatpush1.msra.mxu0 %v2094
        %2151 = vmatprep.subr.mxu0 0.0
        %2152 = vmatpush1.msra.mxu0 %v2095
        %2153 = vmatprep.subr.mxu0 0.0
        %2154 = vmatpush1.msra.mxu0 %v2096
        %2155 = vmatprep.subr.mxu0 0.0
        %2156 = vmatpush1.msra.mxu0 %v2097
        %2157 = vmatprep.subr.mxu0 0.0
        %2158 = vmatpush1.msra.mxu0 %v2098
        %2159 = vmatprep.subr.mxu0 0.0
        %2160 = vmatpush1.msra.mxu0 0.0
        %2161 = vmatprep.subr.mxu0 0.0
        %2162 = vmatpush1.msra.mxu0 0.0
        %2163 = vmatprep.subr.mxu0 0.0
        %2164 = vmatpush1.msra.mxu0 0.0
        %2165 = vmatprep.subr.mxu0 0.0
        %2166 = vmatpush1.msra.mxu0 0.0
        %2167 = vmatprep.subr.mxu0 0.0
        %2168 = vmatpush1.msra.mxu0 0.0
        %2169 = vmatprep.subr.mxu0 0.0
        %2170 = vmatpush1.msra.mxu0 0.0
        %2171 = vmatprep.subr.mxu0 0.0
        %2172 = vmatpush1.msra.mxu0 0.0
        %2173 = vmatprep.subr.mxu0 0.0
        %2174 = vmatpush1.msra.mxu0 0.0
        %2175 = vmatprep.subr.mxu0 0.0
        %2176 = vmatpush1.msra.mxu0 0.0
        %2177 = vmatprep.subr.mxu0 0.0
        %2178 = vmatpush1.msra.mxu0 0.0
        %2179 = vmatprep.subr.mxu0 0.0
        %2180 = vmatpush1.msra.mxu0 0.0
        %2181 = vmatprep.subr.mxu0 0.0
        %2182 = vmatpush1.msra.mxu0 0.0
        %2183 = vmatprep.subr.mxu0 0.0
        %2184 = vmatpush1.msra.mxu0 0.0
        %2185 = vmatprep.subr.mxu0 0.0
        %2186 = vmatpush1.msra.mxu0 0.0
        %2187 = vmatprep.subr.mxu0 0.0
        %2188 = vmatpush1.msra.mxu0 0.0
        %2189 = vmatprep.subr.mxu0 0.0
        %2190 = vmatpush1.msra.mxu0 0.0
        %2191 = vmatprep.mubr.f32.mxu0 0.0
        %2192 = vmatmul.mubr.f32.gmra.mrb[0].mxu0 %v2099
        %v2193 = vpop.f32.mrb[0].mxu0
        %v2194 = vadd.f32 %v2110, %v2193
        %v2195 = vpop.f32.mrb[0].mxu0
        %2196 = vmatprep.mubr.f32.mxu0 0.0
        %2197 = vmatmul.mubr.f32.gmra.mrb[0].mxu0 %v2100
        %v2198 = vpop.f32.mrb[0].mxu0
        %v2199 = vadd.f32 %v2115, %v2198
        %v2200 = vpop.f32.mrb[0].mxu0
        %2201 = vmatprep.mubr.f32.mxu0 0.0
        %2202 = vmatmul.mubr.f32.gmra.mrb[0].mxu0 %v2101
        %v2203 = vpop.f32.mrb[0].mxu0
        %v2204 = vadd.f32 %v2120, %v2203
        %v2205 = vpop.f32.mrb[0].mxu0
        %2206 = vmatprep.mubr.f32.mxu0 0.0
        %2207 = vmatmul.mubr.f32.gmra.mrb[0].mxu0 %v2102
        %v2208 = vpop.f32.mrb[0].mxu0
        %v2209 = vadd.f32 %v2125, %v2208
        %v2210 = vpop.f32.mrb[0].mxu0
        %2211 = vdwg.mxu0
        %v2212 = vxor.u32 %v2194, 2147483648
        %v2213 = vxor.u32 %v2199, 2147483648
        %v2214 = vxor.u32 %v2204, 2147483648
        %v2215 = vxor.u32 %v2209, 2147483648
        %v2216 = vmul.f32 %v2212, 1.442695
        %v2217 = vpow.pop %v2216
        %v2218 = vmul.f32 %v2213, 1.442695
        %v2219 = vpow.pop %v2218
        %v2220 = vmul.f32 %v2214, 1.442695
        %v2221 = vpow.pop %v2220
        %v2222 = vmul.f32 %v2215, 1.442695
        %v2223 = vpow.pop %v2222
        %v2224 = vadd.f32 %v2217, 1.0
        %v2225 = vadd.f32 %v2219, 1.0
        %v2226 = vadd.f32 %v2221, 1.0
        %v2227 = vadd.f32 %v2223, 1.0
        %v2228 = vrcp.pop %v2224
        %v2229 = vmul.f32 1.0, %v2228
        %v2230 = vrcp.pop %v2225
        %v2231 = vmul.f32 1.0, %v2230
        %v2232 = vrcp.pop %v2226
        %v2233 = vmul.f32 1.0, %v2232
        %v2234 = vrcp.pop %v2227
        %v2235 = vmul.f32 1.0, %v2234
        %2237 = vset.pattern.permute.xlu0 0
        %2238 = vperm.xlu0 %2237, %v2229
        %v2239 = vpop.permute.xlu0 %2238
        %2242 = vset.pattern.permute.xlu0 0
        %2243 = vperm.xlu0 %2242, %v2231
        %v2244 = vpop.permute.xlu0 %2243
        %2247 = vset.pattern.permute.xlu0 0
        %2248 = vperm.xlu0 %2247, %v2233
        %v2249 = vpop.permute.xlu0 %2248
        %2252 = vset.pattern.permute.xlu0 0
        %2253 = vperm.xlu0 %2252, %v2235
        %v2254 = vpop.permute.xlu0 %2253
        %v2256 = vmul.f32 %v1740, %v2239
        %v2257 = vmul.f32 %v1742, %v2244
        %v2258 = vmul.f32 %v1744, %v2249
        %v2259 = vmul.f32 %v1746, %v2254
        %v2260 = vadd.f32 %v2256, %v417
        %v2261 = vadd.f32 %v2257, %v419
        %v2262 = vadd.f32 %v2258, %v421
        %v2263 = vadd.f32 %v2259, %v423
        %2264 = vst [vmem:[%s414] sm:$0xff] %v2260
        %2265 = vst [vmem:[%s414 + $0x10] sm:$0xff] %v2261
        %2266 = vst [vmem:[%s414 + $0x20] sm:$0xff] %v2262
        %2267 = vst [vmem:[%s414 + $0x30] sm:$0xff] %v2263
        %2268 = vset.pattern.permute.xlu0 1
        %2269 = vperm.xlu0 %2268, %v2229
        %v2270 = vpop.permute.xlu0 %2269
        %2272 = vset.pattern.permute.xlu0 1
        %2273 = vperm.xlu0 %2272, %v2231
        %v2274 = vpop.permute.xlu0 %2273
        %2276 = vset.pattern.permute.xlu0 1
        %2277 = vperm.xlu0 %2276, %v2233
        %v2278 = vpop.permute.xlu0 %2277
        %2280 = vset.pattern.permute.xlu0 1
        %2281 = vperm.xlu0 %2280, %v2235
        %v2282 = vpop.permute.xlu0 %2281
        %v2284 = vmul.f32 %v1741, %v2270
        %v2285 = vmul.f32 %v1743, %v2274
        %v2286 = vmul.f32 %v1745, %v2278
        %v2287 = vmul.f32 %v1747, %v2282
        %v2288 = vadd.f32 %v2284, %v418
        %v2289 = vadd.f32 %v2285, %v420
        %v2290 = vadd.f32 %v2286, %v422
        %v2291 = vadd.f32 %v2287, %v424
        %2292 = vst [vmem:[%s414 + $0x8] sm:$0xff] %v2288
        %2293 = vst [vmem:[%s414 + $0x18] sm:$0xff] %v2289
        %2294 = vst [vmem:[%s414 + $0x28] sm:$0xff] %v2290
        %2295 = vst [vmem:[%s414 + $0x38] sm:$0xff] %v2291
        %s2296 = sand.u32 %s266, 1
        %s2297 = sand.u32 %s266, 1
        %s2298 = smul.addr %s2297, 64
        %s2299 = scalar_lea.vmem [#allocation3], %s2298
        // Predicated region
        $region88: #{bottle2neck_forward.1} parent=82 // pred_check
          %p2300 = pneg %p276
        $region89: #{bottle2neck_forward.1} parent=82 // pred_check_branch
          %2302 = sbr.rel (%p2300) target = $region91
        $region90: #{bottle2neck_forward.1} parent=82 // pred_region
          %s2303 = smul.u32 2, %s22
          %s2304 = smul.addr %s2303, 8
          %s2305 = scalar_lea.vmem %s11, %s2304
          // Predicated region
          $region92: #{bottle2neck_forward.1} parent=90 // pred_check
            _
          $region93: #{bottle2neck_forward.1} parent=90 // pred_check_branch
            %2307 = sbr.rel (0) target = $region95
          $region94: #{bottle2neck_forward.1} parent=90 // pred_region
            // Predicated region
            $region96: #{bottle2neck_forward.1} parent=94 // pred_check
              _
            $region97: #{bottle2neck_forward.1} parent=94 // pred_check_branch
              %2309 = sbr.rel (0) target = $region99
            $region98: #{bottle2neck_forward.1} parent=94 // pred_region
              loop: start=0, step=1, limit=1
              $region100: #{bottle2neck_forward.1} parent=98 // loop_pre_header
                _
              $region101: #{bottle2neck_forward.1} parent=98 // loop_header
                %s2311 = sphi 0, %s2315
                %p2312 = scmp.ge.s32.totalorder %s2311, 1
                %s2316 = sphi %s2299, %s2299
                %s2317 = sphi %s2305, %s2305
              $region102: #{bottle2neck_forward.1} parent=98 // loop_header_branch
                %2314 = sbr.rel (%p2312) target = $region106
              $region103: #{bottle2neck_forward.1} parent=98 // loop_body
                %v2318 = vld [vmem:[%s2316] sm:$0xff]
                %2319 = vst [vmem:[%s2317] sm:$0xff] %v2318
                %v2320 = vld [vmem:[%s2316 + $0x8] sm:$0xff]
                %2321 = vst [vmem:[%s2317 + $0x8] sm:$0xff] %v2320
                %v2322 = vld [vmem:[%s2316 + $0x10] sm:$0xff]
                %2323 = vst [vmem:[%s2317 + $0x20] sm:$0xff] %v2322
                %v2324 = vld [vmem:[%s2316 + $0x18] sm:$0xff]
                %2325 = vst [vmem:[%s2317 + $0x28] sm:$0xff] %v2324
                %v2326 = vld [vmem:[%s2316 + $0x20] sm:$0xff]
                %2327 = vst [vmem:[%s2317 + $0x40] sm:$0xff] %v2326
                %v2328 = vld [vmem:[%s2316 + $0x28] sm:$0xff]
                %2329 = vst [vmem:[%s2317 + $0x48] sm:$0xff] %v2328
                %v2330 = vld [vmem:[%s2316 + $0x30] sm:$0xff]
                %2331 = vst [vmem:[%s2317 + $0x60] sm:$0xff] %v2330
                %v2332 = vld [vmem:[%s2316 + $0x38] sm:$0xff]
                %2333 = vst [vmem:[%s2317 + $0x68] sm:$0xff] %v2332
              $region104: #{bottle2neck_forward.1} parent=98 // loop_footer
                %s2315 = sadd.s32 1, %s2311
              $region105: #{bottle2neck_forward.1} parent=98 // loop_footer_branch
                %2310 = sbr.rel target = $region101
              $region106: #{bottle2neck_forward.1} parent=98 // loop_exit
                _
            $region99: #{bottle2neck_forward.1} parent=94 // pred_fallthru
              _
            // Predicated region
            $region107: #{bottle2neck_forward.1} parent=94 // pred_check
              _
            $region108: #{bottle2neck_forward.1} parent=94 // pred_check_branch
              %2335 = sbr.rel target = $region110
            $region109: #{bottle2neck_forward.1} parent=94 // pred_region
              _
            $region110: #{bottle2neck_forward.1} parent=94 // pred_fallthru
              _
          $region95: #{bottle2neck_forward.1} parent=90 // pred_fallthru
            _
          %2336 = vnop
        $region91: #{bottle2neck_forward.1} parent=82 // pred_fallthru
          _
      $region83: #{bottle2neck_forward.1} parent=5 // pred_fallthru
        _
      %p2337 = scmp.le.s32.totalorder 2, %s17
      // Predicated region
      $region111: #{bottle2neck_forward.1} parent=5 // pred_check
        %p2338 = pneg %p2337
      $region112: #{bottle2neck_forward.1} parent=5 // pred_check_branch
        %2340 = sbr.rel (%p2338) target = $region114
      $region113: #{bottle2neck_forward.1} parent=5 // pred_region
        %s2341 = ssub.s32 %s17, 2
        // Predicated region
        $region115: #{bottle2neck_forward.1} parent=113 // pred_check
          %p2342 = pneg %p282
        $region116: #{bottle2neck_forward.1} parent=113 // pred_check_branch
          %2344 = sbr.rel (%p2342) target = $region118
        $region117: #{bottle2neck_forward.1} parent=113 // pred_region
          %s2345 = sand.u32 %s267, 1
          %s2346 = sand.u32 %s267, 1
          %s2347 = smul.addr %s2346, 64
          %s2348 = scalar_lea.vmem [#allocation3], %s2347
        $region118: #{bottle2neck_forward.1} parent=113 // pred_fallthru
          _
      $region114: #{bottle2neck_forward.1} parent=5 // pred_fallthru
        _
    $region6: #{bottle2neck_forward.1} parent=1 // loop_footer
      %s21 = sadd.s32 1, %s17
    $region7: #{bottle2neck_forward.1} parent=1 // loop_footer_branch
      %16 = sbr.rel target = $region3
    $region8: #{bottle2neck_forward.1} parent=1 // loop_exit
      _

</llo_original>
